<compile_context>
chip_gen: v7x
topology: tpu7x:2x2x1
jax: 0.10.0
libtpu: 0.0.40
codegen_flags: <defaults>
</compile_context>

<pallas_src>
import functools

import jax
import jax.numpy as jnp
from jax import lax
from jax.experimental import pallas as pl
from jax.experimental.pallas import tpu as pltpu

F32 = jnp.float32
BF16 = jnp.bfloat16

LANE = 128   # hidden dim padded to a multiple of 128 (lane-dense)
SUB = 16     # node counts padded to a multiple of 16 (bf16 sublane tile)


def _round_up(x, m):
    return (x + m - 1) // m * m


def _pad_to(x, shape):
    pads = [(0, t - s) for s, t in zip(x.shape, shape)]
    if any(p[1] for p in pads):
        return jnp.pad(x, pads)
    return x


def _vmem():
    return pl.BlockSpec(memory_space=pltpu.MemorySpace.VMEM)


def _elu(x):
    return jnp.where(x > 0, x, jnp.exp(x) - 1.0)


# ----------------------------------------------------------------------------
# Kernel 1: network-schema view.  Fused per-type (Linear+ELU) -> HeCoGATConv
# with online edge-softmax.  grid = (relation, dst tile, src tile).
# ----------------------------------------------------------------------------
def _gat_kernel(xs_ref, ws_ref, bs_ref, xd_ref, wd_ref, bd_ref,
                al_ref, ar_ref, adj_ref, o_ref,
                m_sc, l_sc, acc_sc, er_sc, *, slope):
    k = pl.program_id(2)

    @pl.when(k == 0)
    def _init():
        m_sc[...] = jnp.full(m_sc.shape, -1e30, F32)
        l_sc[...] = jnp.zeros(l_sc.shape, F32)
        acc_sc[...] = jnp.zeros(acc_sc.shape, F32)
        # dst-side projection + attention logit depend only on the dst tile:
        # compute once per (relation, dst tile) and cache (hoisted out of the
        # src-tile reduction loop).
        fd = _elu(jnp.dot(xd_ref[...], wd_ref[...], preferred_element_type=F32)
                  + bd_ref[...])                                      # (TND, H)
        er_sc[...] = lax.dot_general(fd, ar_ref[0], (((1,), (1,)), ((), ())),
                                     preferred_element_type=F32)      # (TND, 1)

    # fused per-node-type input projection + ELU (feat_drop == 0 -> identity)
    fs = _elu(jnp.dot(xs_ref[0], ws_ref[0], preferred_element_type=F32)
              + bs_ref[0])                                            # (TNS, H)

    # GAT edge logits: e[v, u] = leaky_relu(er[v] + el[u])
    el = lax.dot_general(al_ref[0], fs, (((1,), (1,)), ((), ())),
                         preferred_element_type=F32)                  # (1, TNS)
    e = er_sc[...] + el                                               # (TND, TNS)
    e = jnp.where(e >= 0, e, slope * e)

    # online edge-softmax over src tiles; the single `* adj` masks non-edges
    # and padding (softmax is shift-invariant, so the unmasked row max is fine).
    adj = adj_ref[0].astype(F32)                                      # (TND, TNS)
    m_new = jnp.maximum(m_sc[...], jnp.max(e, axis=1, keepdims=True))
    scale = jnp.exp(m_sc[...] - m_new)
    p = jnp.exp(e - m_new) * adj
    l_sc[...] = scale * l_sc[...] + jnp.sum(p, axis=1, keepdims=True)
    acc_sc[...] = scale * acc_sc[...] + jnp.dot(
        p.astype(BF16), fs.astype(BF16), preferred_element_type=F32)
    m_sc[...] = m_new

    @pl.when(k == pl.num_programs(2) - 1)
    def _finish():
        inv = pl.reciprocal(l_sc[...] + 1e-9, approx=True)            # EUP slot
        o_ref[0] = _elu(acc_sc[...] * inv).astype(o_ref.dtype)        # activation=F.elu


def network_schema_gat(x_src, w_src, b_src, x_dst, w_dst, b_dst, al, ar, adj,
                       *, tile_nd, tile_ns, slope=0.01):
    S, ns_pad, din_s = x_src.shape
    nd_pad, din_d = x_dst.shape
    H = w_src.shape[2]
    tnd = min(tile_nd, nd_pad)
    tns = min(tile_ns, ns_pad)
    grid = (S, nd_pad // tnd, ns_pad // tns)
    return pl.pallas_call(
        functools.partial(_gat_kernel, slope=slope),
        out_shape=jax.ShapeDtypeStruct((S, nd_pad, H), BF16),
        grid_spec=pltpu.PrefetchScalarGridSpec(
            num_scalar_prefetch=0,
            grid=grid,
            in_specs=[
                pl.BlockSpec((1, tns, din_s), lambda s, i, k: (s, k, 0)),
                pl.BlockSpec((1, din_s, H), lambda s, i, k: (s, 0, 0)),
                pl.BlockSpec((1, 1, H), lambda s, i, k: (s, 0, 0)),
                pl.BlockSpec((tnd, din_d), lambda s, i, k: (i, 0)),
                pl.BlockSpec((din_d, H), lambda s, i, k: (0, 0)),
                pl.BlockSpec((1, H), lambda s, i, k: (0, 0)),
                pl.BlockSpec((1, 1, H), lambda s, i, k: (s, 0, 0)),
                pl.BlockSpec((1, 1, H), lambda s, i, k: (s, 0, 0)),
                pl.BlockSpec((1, tnd, tns), lambda s, i, k: (s, i, k)),
            ],
            out_specs=pl.BlockSpec((1, tnd, H), lambda s, i, k: (s, i, 0)),
            scratch_shapes=[pltpu.VMEM((tnd, 1), F32),
                            pltpu.VMEM((tnd, 1), F32),
                            pltpu.VMEM((tnd, H), F32),
                            pltpu.VMEM((tnd, 1), F32)],
        ),
        compiler_params=pltpu.CompilerParams(
            dimension_semantics=("parallel", "parallel", "arbitrary"),
            vmem_limit_bytes=32 * 1024 * 1024),
    )(x_src, w_src, b_src, x_dst, w_dst, b_dst, al, ar, adj)


# ----------------------------------------------------------------------------
# Kernel 2: meta-path view.  Fused (shared Linear+ELU) -> GraphConv(norm='right')
# -> PReLU.  Adjacency rows are pre-normalized by in-degree in the wrapper.
# grid = (metapath, dst tile, src tile).
# ----------------------------------------------------------------------------
def _gcn_kernel(alpha_ref, x_ref, wf_ref, bf_ref, adj_ref, wg_ref, bg_ref,
                o_ref, acc_sc):
    m = pl.program_id(0)
    k = pl.program_id(2)

    @pl.when(k == 0)
    def _init():
        acc_sc[...] = jnp.zeros(acc_sc.shape, F32)

    h = _elu(jnp.dot(x_ref[0], wf_ref[...], preferred_element_type=F32)
             + bf_ref[...])                                           # (TNK, H)
    acc_sc[...] += jnp.dot(adj_ref[0], h.astype(BF16),
                           preferred_element_type=F32)                # (TND, H)

    @pl.when(k == pl.num_programs(2) - 1)
    def _finish():
        y = jnp.dot(acc_sc[...].astype(BF16), wg_ref[0],
                    preferred_element_type=F32) + bg_ref[0]
        alpha = alpha_ref[m]                                          # PReLU slope (SMEM)
        o_ref[0] = jnp.where(y >= 0, y, alpha * y).astype(o_ref.dtype)


def positive_graph_gcn(alphas, x_mg, w_fc, b_fc, adj_norm, w_gcn, b_gcn, *, tile_nd):
    M, nd_pad, din = x_mg.shape
    H = w_fc.shape[1]
    tnd = min(tile_nd, nd_pad)
    tnk = tnd                     # contraction tile over source nodes
    grid = (M, nd_pad // tnd, nd_pad // tnk)
    return pl.pallas_call(
        _gcn_kernel,
        out_shape=jax.ShapeDtypeStruct((M, nd_pad, H), BF16),
        grid_spec=pltpu.PrefetchScalarGridSpec(
            num_scalar_prefetch=0,
            grid=grid,
            in_specs=[
                pl.BlockSpec(memory_space=pltpu.MemorySpace.SMEM),    # PReLU alphas (M,)
                pl.BlockSpec((1, tnk, din), lambda m, i, k: (m, k, 0)),
                pl.BlockSpec((din, H), lambda m, i, k: (0, 0)),
                pl.BlockSpec((1, H), lambda m, i, k: (0, 0)),
                pl.BlockSpec((1, tnd, tnk), lambda m, i, k: (m, i, k)),
                pl.BlockSpec((1, H, H), lambda m, i, k: (m, 0, 0)),
                pl.BlockSpec((1, 1, H), lambda m, i, k: (m, 0, 0)),
            ],
            out_specs=pl.BlockSpec((1, tnd, H), lambda m, i, k: (m, i, 0)),
            scratch_shapes=[pltpu.VMEM((tnd, H), F32)],
        ),
        compiler_params=pltpu.CompilerParams(
            dimension_semantics=("parallel", "parallel", "arbitrary"),
            vmem_limit_bytes=32 * 1024 * 1024),
    )(alphas, x_mg, w_fc, b_fc, adj_norm, w_gcn, b_gcn)


# ----------------------------------------------------------------------------
# Kernel 3: semantic attention over the view axis of h (M, N_pad, H).
# Flat (M*N, H)x(H, H) matmul (leading-dim merge is layout-free), masked node
# mean, softmax over views, weighted sum; padded rows sliced off the output.
# ----------------------------------------------------------------------------
def _sem_attn_kernel(h_ref, w_ref, b_ref, a_ref, o_ref, *, n_valid):
    n_views, n_pad, hdim = h_ref.shape
    h = h_ref[...]                                                    # (M, Np, H) bf16
    h2 = h.reshape(n_views * n_pad, hdim)                             # merge leading dims
    hw = jnp.tanh(jnp.dot(h2, w_ref[...], preferred_element_type=F32)
                  + b_ref[...]).reshape(n_views, n_pad, hdim)         # (M, Np, H) f32
    mask = (lax.broadcasted_iota(jnp.int32, (n_pad, 1), 0) < n_valid).astype(F32)
    s = jnp.sum(hw * mask, axis=1) / n_valid                          # (M, H) mean over nodes
    logits = lax.dot_general(s, a_ref[...], (((1,), (1,)), ((), ())),
                             preferred_element_type=F32)              # (M, 1)
    logits = logits - jnp.max(logits, axis=0, keepdims=True)
    ez = jnp.exp(logits)
    beta = ez / jnp.sum(ez, axis=0, keepdims=True)                    # softmax over views
    z = jnp.sum(beta[:, :, None] * h.astype(F32), axis=0)             # (Np, H)
    o_ref[...] = z[:o_ref.shape[0]]


def semantic_attention(h_stacked, w, b, attn, n_valid):
    H = h_stacked.shape[2]
    return pl.pallas_call(
        functools.partial(_sem_attn_kernel, n_valid=n_valid),
        out_shape=jax.ShapeDtypeStruct((n_valid, H), F32),
        in_specs=[_vmem()] * 4,
        out_specs=_vmem(),
    )(h_stacked, w.astype(BF16), b, attn)
    # TODO(synk): tile the node axis (two-phase grid: mean/beta pass, then
    # weighted-sum pass) for graphs whose (M, N, H) stack exceeds VMEM.


# ----------------------------------------------------------------------------
# Kernel 4: Contrast.proj (Linear-ELU-Linear) + contrastive loss, fused.
# Rows are pre-normalized so the cosine is a single matmul (no rank-1 matmul
# for the denominator); [:batch] rows are sliced inside the kernel.
# ----------------------------------------------------------------------------
def _contrast_kernel(zs_ref, zm_ref, w1_ref, b1_ref, w2_ref, b2_ref, pos_ref,
                     o_ref, *, tau, lam, batch):
    def proj(z):
        hid = _elu(jnp.dot(z, w1_ref[...], preferred_element_type=F32) + b1_ref[...])
        return jnp.dot(hid, w2_ref[...], preferred_element_type=F32) + b2_ref[...]

    def unit_rows(x):
        nrm = jnp.sqrt(jnp.sum(x * x, axis=1, keepdims=True))
        return x / (nrm + 1e-12)

    zs = unit_rows(proj(zs_ref[...]))                                 # (N, H)
    zm = unit_rows(proj(zm_ref[...]))
    pos = pos_ref[...]                                                # (B, N)

    sim_sc = jnp.exp(lax.dot_general(zs[:batch], zm, (((1,), (1,)), ((), ())),
                                     preferred_element_type=F32) / tau)
    sim_sc = sim_sc / (jnp.sum(sim_sc, axis=1, keepdims=True) + 1e-8)
    loss_sc = -jnp.sum(jnp.log(jnp.sum(sim_sc * pos, axis=1, keepdims=True)),
                       axis=0, keepdims=True) / batch                 # (1, 1)

    sim_mp = jnp.exp(lax.dot_general(zm[:batch], zs, (((1,), (1,)), ((), ())),
                                     preferred_element_type=F32) / tau)
    sim_mp = sim_mp / (jnp.sum(sim_mp, axis=1, keepdims=True) + 1e-8)
    loss_mp = -jnp.sum(jnp.log(jnp.sum(sim_mp * pos, axis=1, keepdims=True)),
                       axis=0, keepdims=True) / batch

    o_ref[...] = lam * loss_sc + (1.0 - lam) * loss_mp


def contrast_loss(z_sc, z_mp, w1, b1, w2, b2, pos, tau, lam):
    batch = pos.shape[0]
    return pl.pallas_call(
        functools.partial(_contrast_kernel, tau=tau, lam=lam, batch=batch),
        out_shape=jax.ShapeDtypeStruct((1, 1), F32),
        in_specs=[_vmem()] * 7,
        out_specs=_vmem(),
    )(z_sc, z_mp, w1, b1, w2, b2, pos)


# ----------------------------------------------------------------------------
# Full HeCo forward (padding / stacking glue in plain JAX, hot paths in Pallas)
# ----------------------------------------------------------------------------
def heco_forward(params, relations, feats, adjs_rel, mg_adjs, mg_feats, pos,
                 tau, lam, *, tile_nd=256, tile_ns=512):
    # tile_nd/tile_ns default sizes fit v7x's 64 MiB VMEM with double
    # buffering; v5e/v6e can roughly double tile_ns.
    dtype = relations[0][2]
    stypes = [r[0] for r in relations]

    hidden = params["fc"][dtype]["w"].shape[1]
    H = _round_up(hidden, LANE)                         # lane-dense hidden dim

    nd = feats[dtype].shape[0]
    tnd = tile_nd if nd > tile_nd else _round_up(nd, SUB)
    nd_pad = _round_up(nd, tnd)

    ns_max = max(feats[st].shape[0] for st in stypes)
    tns = tile_ns if ns_max > tile_ns else _round_up(ns_max, SUB)
    ns_pad = _round_up(ns_max, tns)

    din_s = _round_up(max(feats[st].shape[1] for st in stypes), 8)
    din_d = _round_up(feats[dtype].shape[1], 8)

    # ---- network-schema (GAT) view: stacked / padded inputs --------------
    x_src = jnp.stack([_pad_to(feats[st], (ns_pad, din_s)) for st in stypes]).astype(BF16)
    w_src = jnp.stack([_pad_to(params["fc"][st]["w"], (din_s, H)) for st in stypes]).astype(BF16)
    b_src = jnp.stack([_pad_to(params["fc"][st]["b"], (1, H)) for st in stypes])
    al = jnp.stack([_pad_to(params["gat"][st]["al"], (1, H)) for st in stypes])
    ar = jnp.stack([_pad_to(params["gat"][st]["ar"], (1, H)) for st in stypes])
    adj_s = jnp.stack([_pad_to(a, (nd_pad, ns_pad)) for a in adjs_rel]).astype(BF16)
    x_dst = _pad_to(feats[dtype], (nd_pad, din_d)).astype(BF16)
    w_dst = _pad_to(params["fc"][dtype]["w"], (din_d, H)).astype(BF16)
    b_dst = _pad_to(params["fc"][dtype]["b"], (1, H))

    h_sc = network_schema_gat(x_src, w_src, b_src, x_dst, w_dst, b_dst,
                              al, ar, adj_s, tile_nd=tnd, tile_ns=tns)
    z_sc = semantic_attention(h_sc,
                              _pad_to(params["sc_attn"]["w"], (H, H)),
                              _pad_to(params["sc_attn"]["b"], (1, H)),
                              _pad_to(params["sc_attn"]["a"], (1, H)), nd)

    # ---- meta-path (GraphConv) view: stacked / padded inputs -------------
    adj_norm = []
    for a in mg_adjs:
        deg = jnp.maximum(jnp.sum(a, axis=1, keepdims=True), 1.0)     # norm='right'
        adj_norm.append(_pad_to(a / deg, (nd_pad, nd_pad)))
    adj_norm = jnp.stack(adj_norm).astype(BF16)
    x_mg = jnp.stack([_pad_to(f, (nd_pad, din_d)) for f in mg_feats]).astype(BF16)
    w_gcn = jnp.stack([_pad_to(g["w"], (H, H)) for g in params["gcn"]]).astype(BF16)
    b_gcn = jnp.stack([_pad_to(g["b"], (1, H)) for g in params["gcn"]])
    alphas = jnp.stack([g["alpha"].reshape(()) for g in params["gcn"]])

    h_mp = positive_graph_gcn(alphas, x_mg, w_dst, b_dst, adj_norm, w_gcn, b_gcn,
                              tile_nd=tnd)
    z_mp = semantic_attention(h_mp,
                              _pad_to(params["mp_attn"]["w"], (H, H)),
                              _pad_to(params["mp_attn"]["b"], (1, H)),
                              _pad_to(params["mp_attn"]["a"], (1, H)), nd)

    # ---- contrastive loss (proj fused in-kernel) --------------------------
    w1, b1, w2, b2 = params["proj"]
    loss = contrast_loss(z_sc, z_mp,
                         _pad_to(w1, (H, H)), _pad_to(b1, (1, H)),
                         _pad_to(w2, (H, H)), _pad_to(b2, (1, H)),
                         pos, tau, lam)
    batch = pos.shape[0]
    return loss[0, 0], z_mp[:batch, :hidden]


# ----------------------------------------------------------------------------
# Deterministic parameter / data construction
# ----------------------------------------------------------------------------
def xavier_normal(key, shape, fan_in, fan_out, gain=2.0 ** 0.5):
    std = gain * (2.0 / (fan_in + fan_out)) ** 0.5
    return std * jax.random.normal(key, shape, F32)


if __name__ == "__main__":
    hidden = 64
    N, B = 8, 4                      # N target nodes (incl. positives), B batch
    relations = [("a", "ap", "p"), ("s", "sp", "p")]
    in_dims = {"p": 48, "a": 40, "s": 24}
    num_nodes = {"p": N, "a": 12, "s": 16}
    tau, lam = 0.8, 0.5
    num_mp = len(relations)

    keys = iter(jax.random.split(jax.random.PRNGKey(0), 64))

    params = {"fc": {}, "gat": {}, "gcn": []}
    for nt, d_in in in_dims.items():
        params["fc"][nt] = {"w": xavier_normal(next(keys), (d_in, hidden), d_in, hidden),
                            "b": jnp.zeros((1, hidden), F32)}
    for stype, _, _ in relations:
        params["gat"][stype] = {"al": xavier_normal(next(keys), (1, hidden), hidden, 1),
                                "ar": xavier_normal(next(keys), (1, hidden), hidden, 1)}
    params["sc_attn"] = {"w": xavier_normal(next(keys), (hidden, hidden), hidden, hidden),
                         "b": jnp.zeros((1, hidden), F32),
                         "a": xavier_normal(next(keys), (1, hidden), hidden, 1)}
    for _ in range(num_mp):
        params["gcn"].append({"w": xavier_normal(next(keys), (hidden, hidden), hidden, hidden),
                              "b": jnp.zeros((1, hidden), F32),
                              "alpha": jnp.full((1, 1), 0.25, F32)})
    params["mp_attn"] = {"w": xavier_normal(next(keys), (hidden, hidden), hidden, hidden),
                         "b": jnp.zeros((1, hidden), F32),
                         "a": xavier_normal(next(keys), (1, hidden), hidden, 1)}
    params["proj"] = (xavier_normal(next(keys), (hidden, hidden), hidden, hidden),
                      jnp.zeros((1, hidden), F32),
                      xavier_normal(next(keys), (hidden, hidden), hidden, hidden),
                      jnp.zeros((1, hidden), F32))

    # synthetic heterogeneous graph data (dense adjacency masks adj[dst, src])
    feats = {nt: jax.random.normal(next(keys), (num_nodes[nt], in_dims[nt]), F32)
             for nt in in_dims}
    adjs_rel = []
    for stype, _, _ in relations:
        a = (jax.random.uniform(next(keys), (N, num_nodes[stype])) < 0.5).astype(F32)
        a = a.at[:, 0].set(1.0)      # every dst node has >=1 neighbor
        adjs_rel.append(a)
    mg_adjs = []
    for _ in range(num_mp):
        a = (jax.random.uniform(next(keys), (N, N)) < 0.5).astype(F32)
        mg_adjs.append(jnp.maximum(a, jnp.eye(N, dtype=F32)))
    mg_feats = [jax.random.normal(next(keys), (N, in_dims["p"]), F32) for _ in range(num_mp)]
    pos = (jax.random.uniform(next(keys), (B, N)) < 0.3).astype(F32)
    pos = jnp.maximum(pos, jnp.eye(B, N, dtype=F32))   # every batch node has a positive

    loss, z_mp_batch = heco_forward(params, relations, feats, adjs_rel,
                                    mg_adjs, mg_feats, pos, tau, lam)
    jax.block_until_ready((loss, z_mp_batch))
    assert z_mp_batch.shape == (B, hidden)
    assert jnp.isfinite(loss)
    print("KERNEL_OK")
</pallas_src>

<mosaic_0001>
module attributes {stable_mosaic.version = 11 : i64} {
  func.func @_gat_kernel(%arg0: i32, %arg1: i32, %arg2: i32, %arg3: memref<1x16x40xbf16, #tpu.memory_space<vmem>>, %arg4: memref<1x40x128xbf16, #tpu.memory_space<vmem>>, %arg5: memref<1x1x128xf32, #tpu.memory_space<vmem>>, %arg6: memref<16x48xbf16, #tpu.memory_space<vmem>>, %arg7: memref<48x128xbf16, #tpu.memory_space<vmem>>, %arg8: memref<1x128xf32, #tpu.memory_space<vmem>>, %arg9: memref<1x1x128xf32, #tpu.memory_space<vmem>>, %arg10: memref<1x1x128xf32, #tpu.memory_space<vmem>>, %arg11: memref<1x16x16xbf16, #tpu.memory_space<vmem>>, %arg12: memref<1x16x128xbf16, #tpu.memory_space<vmem>>, %arg13: memref<16x1xf32, #tpu.memory_space<vmem>>, %arg14: memref<16x1xf32, #tpu.memory_space<vmem>>, %arg15: memref<16x128xf32, #tpu.memory_space<vmem>>, %arg16: memref<16x1xf32, #tpu.memory_space<vmem>>) attributes {dimension_semantics = [#tpu.dimension_semantics<parallel>, #tpu.dimension_semantics<parallel>, #tpu.dimension_semantics<arbitrary>], iteration_bounds = array<i64: 2, 1, 1>, scalar_prefetch = 0 : i64, scratch_operands = 4 : i64, tpu.core_type = #tpu.core_type<tc>, window_params = [{transform_indices = @transform_0, window_bounds = array<i64: 1, 16, 40>}, {transform_indices = @transform_1, window_bounds = array<i64: 1, 40, 128>}, {transform_indices = @transform_2, window_bounds = array<i64: 1, 1, 128>}, {transform_indices = @transform_3, window_bounds = array<i64: 16, 48>}, {pipeline_mode = #tpu.pipeline_mode<synchronous>, transform_indices = @transform_4, window_bounds = array<i64: 48, 128>}, {pipeline_mode = #tpu.pipeline_mode<synchronous>, transform_indices = @transform_5, window_bounds = array<i64: 1, 128>}, {transform_indices = @transform_6, window_bounds = array<i64: 1, 1, 128>}, {transform_indices = @transform_7, window_bounds = array<i64: 1, 1, 128>}, {transform_indices = @transform_8, window_bounds = array<i64: 1, 16, 16>}, {transform_indices = @transform_9, window_bounds = array<i64: 1, 16, 128>}]} {
    %c0_i32 = arith.constant 0 : i32
    %0 = arith.cmpi eq, %arg2, %c0_i32 : i32
    %1 = arith.extui %0 : i1 to i32
    %c0_i32_0 = arith.constant 0 : i32
    %2 = arith.cmpi ne, %1, %c0_i32_0 : i32
    scf.if %2 {
      %cst_41 = arith.constant -1.000000e+30 : f32
      %62 = vector.broadcast %cst_41 : f32 to vector<16x1xf32>
      %c0_42 = arith.constant 0 : index
      %c0_43 = arith.constant 0 : index
      %63 = vector.load %arg13[%c0_42, %c0_43] : memref<16x1xf32, #tpu.memory_space<vmem>>, vector<16x1xf32>
      tpu.vector_store %arg13[%c0_42, %c0_43], %62 {strides = array<i32>} : memref<16x1xf32, #tpu.memory_space<vmem>>, vector<16x1xf32>,
      %cst_44 = arith.constant 0.000000e+00 : f32
      %64 = vector.broadcast %cst_44 : f32 to vector<16x1xf32>
      %c0_45 = arith.constant 0 : index
      %c0_46 = arith.constant 0 : index
      %65 = vector.load %arg14[%c0_45, %c0_46] : memref<16x1xf32, #tpu.memory_space<vmem>>, vector<16x1xf32>
      tpu.vector_store %arg14[%c0_45, %c0_46], %64 {strides = array<i32>} : memref<16x1xf32, #tpu.memory_space<vmem>>, vector<16x1xf32>,
      %cst_47 = arith.constant 0.000000e+00 : f32
      %66 = vector.broadcast %cst_47 : f32 to vector<16x128xf32>
      %c0_48 = arith.constant 0 : index
      %c0_49 = arith.constant 0 : index
      %67 = vector.load %arg15[%c0_48, %c0_49] : memref<16x128xf32, #tpu.memory_space<vmem>>, vector<16x128xf32>
      tpu.vector_store %arg15[%c0_48, %c0_49], %66 {strides = array<i32>} : memref<16x128xf32, #tpu.memory_space<vmem>>, vector<16x128xf32>,
      %c0_50 = arith.constant 0 : index
      %c0_51 = arith.constant 0 : index
      %68 = vector.load %arg6[%c0_50, %c0_51] : memref<16x48xbf16, #tpu.memory_space<vmem>>, vector<16x48xbf16>
      %c0_52 = arith.constant 0 : index
      %c0_53 = arith.constant 0 : index
      %69 = vector.load %arg7[%c0_52, %c0_53] : memref<48x128xbf16, #tpu.memory_space<vmem>>, vector<48x128xbf16>
      %cst_54 = arith.constant dense<0.000000e+00> : vector<16x128xf32>
      %70 = tpu.matmul %68, %69, %cst_54 {dimension_numbers = #tpu.dot_dimension_numbers<[1], [0], [0], [1], [0, 0, 1, 1], [], []>} : vector<16x48xbf16>, vector<48x128xbf16>, vector<16x128xf32> -> vector<16x128xf32>
      %c0_55 = arith.constant 0 : index
      %c0_56 = arith.constant 0 : index
      %71 = vector.load %arg8[%c0_55, %c0_56] : memref<1x128xf32, #tpu.memory_space<vmem>>, vector<1x128xf32>
      %72 = vector.broadcast %71 : vector<1x128xf32> to vector<16x128xf32>
      %73 = arith.addf %70, %72 : vector<16x128xf32>
      %cst_57 = arith.constant 0.000000e+00 : f32
      %74 = vector.broadcast %cst_57 : f32 to vector<16x128xf32>
      %75 = arith.cmpf ogt, %73, %74 : vector<16x128xf32>
      %76 = math.exp %73 : vector<16x128xf32>
      %cst_58 = arith.constant 1.000000e+00 : f32
      %77 = vector.broadcast %cst_58 : f32 to vector<16x128xf32>
      %78 = arith.subf %76, %77 : vector<16x128xf32>
      %79 = arith.select %75, %73, %78 : vector<16x128xi1>, vector<16x128xf32>
      %c0_59 = arith.constant 0 : index
      %c0_60 = arith.constant 0 : index
      %c0_61 = arith.constant 0 : index
      %80 = vector.load %arg10[%c0_59, %c0_60, %c0_61] : memref<1x1x128xf32, #tpu.memory_space<vmem>>, vector<1x1x128xf32>
      %81 = vector.shape_cast %80 : vector<1x1x128xf32> to vector<1x128xf32>
      %cst_62 = arith.constant dense<0.000000e+00> : vector<16x1xf32>
      %82 = tpu.matmul %79, %81, %cst_62 {dimension_numbers = #tpu.dot_dimension_numbers<[1], [1], [0], [0], [0, 0, 1, 0], [], []>} : vector<16x128xf32>, vector<1x128xf32>, vector<16x1xf32> -> vector<16x1xf32>
      %c0_63 = arith.constant 0 : index
      %c0_64 = arith.constant 0 : index
      %83 = vector.load %arg16[%c0_63, %c0_64] : memref<16x1xf32, #tpu.memory_space<vmem>>, vector<16x1xf32>
      tpu.vector_store %arg16[%c0_63, %c0_64], %82 {strides = array<i32>} : memref<16x1xf32, #tpu.memory_space<vmem>>, vector<16x1xf32>,
    } else {
    }
    %c0 = arith.constant 0 : index
    %c0_1 = arith.constant 0 : index
    %c0_2 = arith.constant 0 : index
    %3 = vector.load %arg3[%c0, %c0_1, %c0_2] : memref<1x16x40xbf16, #tpu.memory_space<vmem>>, vector<1x16x40xbf16>
    %4 = vector.shape_cast %3 : vector<1x16x40xbf16> to vector<16x40xbf16>
    %c0_3 = arith.constant 0 : index
    %c0_4 = arith.constant 0 : index
    %c0_5 = arith.constant 0 : index
    %5 = vector.load %arg4[%c0_3, %c0_4, %c0_5] : memref<1x40x128xbf16, #tpu.memory_space<vmem>>, vector<1x40x128xbf16>
    %6 = vector.shape_cast %5 : vector<1x40x128xbf16> to vector<40x128xbf16>
    %cst = arith.constant dense<0.000000e+00> : vector<16x128xf32>
    %7 = tpu.matmul %4, %6, %cst {dimension_numbers = #tpu.dot_dimension_numbers<[1], [0], [0], [1], [0, 0, 1, 1], [], []>} : vector<16x40xbf16>, vector<40x128xbf16>, vector<16x128xf32> -> vector<16x128xf32>
    %c0_6 = arith.constant 0 : index
    %c0_7 = arith.constant 0 : index
    %c0_8 = arith.constant 0 : index
    %8 = vector.load %arg5[%c0_6, %c0_7, %c0_8] : memref<1x1x128xf32, #tpu.memory_space<vmem>>, vector<1x1x128xf32>
    %9 = vector.shape_cast %8 : vector<1x1x128xf32> to vector<1x128xf32>
    %10 = vector.broadcast %9 : vector<1x128xf32> to vector<16x128xf32>
    %11 = arith.addf %7, %10 : vector<16x128xf32>
    %cst_9 = arith.constant 0.000000e+00 : f32
    %12 = vector.broadcast %cst_9 : f32 to vector<16x128xf32>
    %13 = arith.cmpf ogt, %11, %12 : vector<16x128xf32>
    %14 = math.exp %11 : vector<16x128xf32>
    %cst_10 = arith.constant 1.000000e+00 : f32
    %15 = vector.broadcast %cst_10 : f32 to vector<16x128xf32>
    %16 = arith.subf %14, %15 : vector<16x128xf32>
    %17 = arith.select %13, %11, %16 : vector<16x128xi1>, vector<16x128xf32>
    %c0_11 = arith.constant 0 : index
    %c0_12 = arith.constant 0 : index
    %c0_13 = arith.constant 0 : index
    %18 = vector.load %arg9[%c0_11, %c0_12, %c0_13] : memref<1x1x128xf32, #tpu.memory_space<vmem>>, vector<1x1x128xf32>
    %19 = vector.shape_cast %18 : vector<1x1x128xf32> to vector<1x128xf32>
    %cst_14 = arith.constant dense<0.000000e+00> : vector<1x16xf32>
    %20 = tpu.matmul %19, %17, %cst_14 {dimension_numbers = #tpu.dot_dimension_numbers<[1], [1], [0], [0], [0, 0, 1, 0], [], []>} : vector<1x128xf32>, vector<16x128xf32>, vector<1x16xf32> -> vector<1x16xf32>
    %c0_15 = arith.constant 0 : index
    %c0_16 = arith.constant 0 : index
    %21 = vector.load %arg16[%c0_15, %c0_16] : memref<16x1xf32, #tpu.memory_space<vmem>>, vector<16x1xf32>
    %22 = vector.broadcast %21 : vector<16x1xf32> to vector<16x16xf32>
    %23 = vector.broadcast %20 : vector<1x16xf32> to vector<16x16xf32>
    %24 = arith.addf %22, %23 : vector<16x16xf32>
    %cst_17 = arith.constant 0.000000e+00 : f32
    %25 = vector.broadcast %cst_17 : f32 to vector<16x16xf32>
    %26 = arith.cmpf oge, %24, %25 : vector<16x16xf32>
    %cst_18 = arith.constant 0.00999999977 : f32
    %27 = vector.broadcast %cst_18 : f32 to vector<16x16xf32>
    %28 = arith.mulf %27, %24 : vector<16x16xf32>
    %29 = arith.select %26, %24, %28 : vector<16x16xi1>, vector<16x16xf32>
    %c0_19 = arith.constant 0 : index
    %c0_20 = arith.constant 0 : index
    %c0_21 = arith.constant 0 : index
    %30 = vector.load %arg11[%c0_19, %c0_20, %c0_21] : memref<1x16x16xbf16, #tpu.memory_space<vmem>>, vector<1x16x16xbf16>
    %31 = vector.shape_cast %30 : vector<1x16x16xbf16> to vector<16x16xbf16>
    %32 = arith.extf %31 : vector<16x16xbf16> to vector<16x16xf32>
    %c0_22 = arith.constant 0 : index
    %c0_23 = arith.constant 0 : index
    %33 = vector.load %arg13[%c0_22, %c0_23] : memref<16x1xf32, #tpu.memory_space<vmem>>, vector<16x1xf32>
    %cst_24 = arith.constant dense<0xFF800000> : vector<16xf32>
    %34 = vector.multi_reduction <maximumf>, %29, %cst_24 [1] : vector<16x16xf32> to vector<16xf32>
    %35 = vector.shape_cast %34 : vector<16xf32> to vector<16x1xf32>
    %36 = arith.maximumf %33, %35 : vector<16x1xf32>
    %c0_25 = arith.constant 0 : index
    %c0_26 = arith.constant 0 : index
    %37 = vector.load %arg13[%c0_25, %c0_26] : memref<16x1xf32, #tpu.memory_space<vmem>>, vector<16x1xf32>
    %38 = arith.subf %37, %36 : vector<16x1xf32>
    %39 = math.exp %38 : vector<16x1xf32>
    %40 = vector.broadcast %36 : vector<16x1xf32> to vector<16x16xf32>
    %41 = arith.subf %29, %40 : vector<16x16xf32>
    %42 = math.exp %41 : vector<16x16xf32>
    %43 = arith.mulf %42, %32 : vector<16x16xf32>
    %c0_27 = arith.constant 0 : index
    %c0_28 = arith.constant 0 : index
    %44 = vector.load %arg14[%c0_27, %c0_28] : memref<16x1xf32, #tpu.memory_space<vmem>>, vector<16x1xf32>
    %45 = arith.mulf %39, %44 : vector<16x1xf32>
    %cst_29 = arith.constant dense<0.000000e+00> : vector<16xf32>
    %46 = vector.multi_reduction <add>, %43, %cst_29 [1] : vector<16x16xf32> to vector<16xf32>
    %47 = vector.shape_cast %46 : vector<16xf32> to vector<16x1xf32>
    %48 = arith.addf %45, %47 : vector<16x1xf32>
    %c0_30 = arith.constant 0 : index
    %c0_31 = arith.constant 0 : index
    %49 = vector.load %arg14[%c0_30, %c0_31] : memref<16x1xf32, #tpu.memory_space<vmem>>, vector<16x1xf32>
    tpu.vector_store %arg14[%c0_30, %c0_31], %48 {strides = array<i32>} : memref<16x1xf32, #tpu.memory_space<vmem>>, vector<16x1xf32>,
    %c0_32 = arith.constant 0 : index
    %c0_33 = arith.constant 0 : index
    %50 = vector.load %arg15[%c0_32, %c0_33] : memref<16x128xf32, #tpu.memory_space<vmem>>, vector<16x128xf32>
    %51 = vector.broadcast %39 : vector<16x1xf32> to vector<16x128xf32>
    %52 = arith.mulf %51, %50 : vector<16x128xf32>
    %53 = arith.truncf %43 : vector<16x16xf32> to vector<16x16xbf16>
    %54 = arith.truncf %17 : vector<16x128xf32> to vector<16x128xbf16>
    %cst_34 = arith.constant dense<0.000000e+00> : vector<16x128xf32>
    %55 = tpu.matmul %53, %54, %cst_34 {dimension_numbers = #tpu.dot_dimension_numbers<[1], [0], [0], [1], [0, 0, 1, 1], [], []>} : vector<16x16xbf16>, vector<16x128xbf16>, vector<16x128xf32> -> vector<16x128xf32>
    %56 = arith.addf %52, %55 : vector<16x128xf32>
    %c0_35 = arith.constant 0 : index
    %c0_36 = arith.constant 0 : index
    %57 = vector.load %arg15[%c0_35, %c0_36] : memref<16x128xf32, #tpu.memory_space<vmem>>, vector<16x128xf32>
    tpu.vector_store %arg15[%c0_35, %c0_36], %56 {strides = array<i32>} : memref<16x128xf32, #tpu.memory_space<vmem>>, vector<16x128xf32>,
    %c0_37 = arith.constant 0 : index
    %c0_38 = arith.constant 0 : index
    %58 = vector.load %arg13[%c0_37, %c0_38] : memref<16x1xf32, #tpu.memory_space<vmem>>, vector<16x1xf32>
    tpu.vector_store %arg13[%c0_37, %c0_38], %36 {strides = array<i32>} : memref<16x1xf32, #tpu.memory_space<vmem>>, vector<16x1xf32>,
    %c0_i32_39 = arith.constant 0 : i32
    %59 = arith.cmpi eq, %arg2, %c0_i32_39 : i32
    %60 = arith.extui %59 : i1 to i32
    %c0_i32_40 = arith.constant 0 : i32
    %61 = arith.cmpi ne, %60, %c0_i32_40 : i32
    scf.if %61 {
      %c0_41 = arith.constant 0 : index
      %c0_42 = arith.constant 0 : index
      %62 = vector.load %arg14[%c0_41, %c0_42] : memref<16x1xf32, #tpu.memory_space<vmem>>, vector<16x1xf32>
      %cst_43 = arith.constant 9.99999971E-10 : f32
      %63 = vector.broadcast %cst_43 : f32 to vector<16x1xf32>
      %64 = arith.addf %62, %63 : vector<16x1xf32>
      %65 = tpu.reciprocal %64 {approx = true} : vector<16x1xf32> -> vector<16x1xf32>
      %c0_44 = arith.constant 0 : index
      %c0_45 = arith.constant 0 : index
      %66 = vector.load %arg15[%c0_44, %c0_45] : memref<16x128xf32, #tpu.memory_space<vmem>>, vector<16x128xf32>
      %67 = vector.broadcast %65 : vector<16x1xf32> to vector<16x128xf32>
      %68 = arith.mulf %66, %67 : vector<16x128xf32>
      %cst_46 = arith.constant 0.000000e+00 : f32
      %69 = vector.broadcast %cst_46 : f32 to vector<16x128xf32>
      %70 = arith.cmpf ogt, %68, %69 : vector<16x128xf32>
      %71 = math.exp %68 : vector<16x128xf32>
      %cst_47 = arith.constant 1.000000e+00 : f32
      %72 = vector.broadcast %cst_47 : f32 to vector<16x128xf32>
      %73 = arith.subf %71, %72 : vector<16x128xf32>
      %74 = arith.select %70, %68, %73 : vector<16x128xi1>, vector<16x128xf32>
      %75 = arith.truncf %74 : vector<16x128xf32> to vector<16x128xbf16>
      %c0_48 = arith.constant 0 : index
      %c0_49 = arith.constant 0 : index
      %c0_50 = arith.constant 0 : index
      %76 = vector.load %arg12[%c0_48, %c0_49, %c0_50] : memref<1x16x128xbf16, #tpu.memory_space<vmem>>, vector<1x16x128xbf16>
      %77 = vector.shape_cast %76 : vector<1x16x128xbf16> to vector<16x128xbf16>
      %78 = vector.shape_cast %75 : vector<16x128xbf16> to vector<1x16x128xbf16>
      tpu.vector_store %arg12[%c0_48, %c0_49, %c0_50], %78 {strides = array<i32>} : memref<1x16x128xbf16, #tpu.memory_space<vmem>>, vector<1x16x128xbf16>,
    } else {
    }
    return
  }
  func.func @transform_0(%arg0: i32, %arg1: i32, %arg2: i32) -> (i32, i32, i32) {
    %c0_i32 = arith.constant 0 : i32
    %c0_i32_0 = arith.constant 0 : i32
    return %arg0, %arg2, %c0_i32 : i32, i32, i32
  }
  func.func @transform_1(%arg0: i32, %arg1: i32, %arg2: i32) -> (i32, i32, i32) {
    %c0_i32 = arith.constant 0 : i32
    %c0_i32_0 = arith.constant 0 : i32
    %c0_i32_1 = arith.constant 0 : i32
    return %arg0, %c0_i32, %c0_i32_0 : i32, i32, i32
  }
  func.func @transform_2(%arg0: i32, %arg1: i32, %arg2: i32) -> (i32, i32, i32) {
    %c0_i32 = arith.constant 0 : i32
    %c0_i32_0 = arith.constant 0 : i32
    %c0_i32_1 = arith.constant 0 : i32
    return %arg0, %c0_i32, %c0_i32_0 : i32, i32, i32
  }
  func.func @transform_3(%arg0: i32, %arg1: i32, %arg2: i32) -> (i32, i32) {
    %c0_i32 = arith.constant 0 : i32
    %c0_i32_0 = arith.constant 0 : i32
    return %arg1, %c0_i32 : i32, i32
  }
  func.func @transform_4(%arg0: i32, %arg1: i32, %arg2: i32) -> (i32, i32) {
    %c0_i32 = arith.constant 0 : i32
    %c0_i32_0 = arith.constant 0 : i32
    %c0_i32_1 = arith.constant 0 : i32
    return %c0_i32, %c0_i32_0 : i32, i32
  }
  func.func @transform_5(%arg0: i32, %arg1: i32, %arg2: i32) -> (i32, i32) {
    %c0_i32 = arith.constant 0 : i32
    %c0_i32_0 = arith.constant 0 : i32
    %c0_i32_1 = arith.constant 0 : i32
    return %c0_i32, %c0_i32_0 : i32, i32
  }
  func.func @transform_6(%arg0: i32, %arg1: i32, %arg2: i32) -> (i32, i32, i32) {
    %c0_i32 = arith.constant 0 : i32
    %c0_i32_0 = arith.constant 0 : i32
    %c0_i32_1 = arith.constant 0 : i32
    return %arg0, %c0_i32, %c0_i32_0 : i32, i32, i32
  }
  func.func @transform_7(%arg0: i32, %arg1: i32, %arg2: i32) -> (i32, i32, i32) {
    %c0_i32 = arith.constant 0 : i32
    %c0_i32_0 = arith.constant 0 : i32
    %c0_i32_1 = arith.constant 0 : i32
    return %arg0, %c0_i32, %c0_i32_0 : i32, i32, i32
  }
  func.func @transform_8(%arg0: i32, %arg1: i32, %arg2: i32) -> (i32, i32, i32) {
    %c0_i32 = arith.constant 0 : i32
    return %arg0, %arg1, %arg2 : i32, i32, i32
  }
  func.func @transform_9(%arg0: i32, %arg1: i32, %arg2: i32) -> (i32, i32, i32) {
    %c0_i32 = arith.constant 0 : i32
    %c0_i32_0 = arith.constant 0 : i32
    return %arg0, %arg1, %c0_i32 : i32, i32, i32
  }
}

</mosaic_0001>

<llo_original>
// kernel: tpu_custom_call.1
$region0: #{tpu_custom_call.1}
  #allocation0 [shape = 'u32[]', space=smem, size = 0x4, offset = 0x4, fixed_abs, tag = 'smem constant byte address 0x4 - core index']
  #allocation1 [shape = 'u32[144,128]{1,0:T(1,128)}', space=vmem, size = 0x12000, scoped, tag = 'internal scratch']
  #allocation2 [shape = 'f32[16,1]{1,0:T(8,128)}', space=vmem, size = 0x2000, scoped, tag = 'scratch operand']
  #allocation3 [shape = 'f32[16,1]{1,0:T(8,128)}', space=vmem, size = 0x2000, scoped, tag = 'scratch operand']
  #allocation4 [shape = 'f32[16,128]{1,0:T(8,128)}', space=vmem, size = 0x2000, scoped, tag = 'scratch operand']
  #allocation5 [shape = 'f32[16,1]{1,0:T(8,128)}', space=vmem, size = 0x2000, scoped, tag = 'scratch operand']
  %s0 = inlined_call_operand.hbm [shape: bf16[2,16,40], index: 0, kind: input, shape index: {}]
  %s1 = inlined_call_operand.hbm [shape: bf16[2,40,128], index: 1, kind: input, shape index: {}]
  %s2 = inlined_call_operand.vmem [shape: f32[2,1,128], index: 2, kind: input, shape index: {}]
  %s3 = inlined_call_operand.vmem [shape: bf16[16,48], index: 3, kind: input, shape index: {}]
  %s4 = inlined_call_operand.hbm [shape: bf16[48,128], index: 4, kind: input, shape index: {}]
  %s5 = inlined_call_operand.hbm [shape: f32[1,128], index: 5, kind: input, shape index: {}]
  %s6 = inlined_call_operand.vmem [shape: f32[2,1,128], index: 6, kind: input, shape index: {}]
  %s7 = inlined_call_operand.vmem [shape: f32[2,1,128], index: 7, kind: input, shape index: {}]
  %s8 = inlined_call_operand.vmem [shape: bf16[2,16,16], index: 8, kind: input, shape index: {}]
  %s9 = inlined_call_operand.hbm [shape: bf16[2,16,128], index: 9, kind: output, shape index: {}]
  %s10 = sld [smem:[#allocation0]]
  $region93: #{tpu_custom_call.1} parent=0
    _
  %s12 = ssub.s32 1, %s10
  %s13 = scalar_select 0, %s12, %s10
  $region1: #{tpu_custom_call.1} parent=0
    #allocation6 [shape = 'u8[8192]{0}', space=vmem, size = 0x2000, scoped, tag = 'input window, operand 0']
    #allocation7 [shape = 's32[2]{0}', space=sflag, size = 0x8, scoped, tag = 'scoped memory for tpu_custom_call.1']
    #allocation8 [shape = 's32[2]{0}', space=sflag, size = 0x8, scoped, tag = 'scoped memory for tpu_custom_call.1']
    #allocation9 [shape = 'u8[20480]{0}', space=vmem, size = 0x5000, scoped, tag = 'input window, operand 1']
    #allocation10 [shape = 's32[2]{0}', space=sflag, size = 0x8, scoped, tag = 'scoped memory for tpu_custom_call.1']
    #allocation11 [shape = 'u8[12288]{0}', space=vmem, size = 0x3000, scoped, tag = 'input window, operand 4, single buffered']
    #allocation12 [shape = 'u8[512]{0}', space=vmem, size = 0x400, scoped, tag = 'input window, operand 5, single buffered']
    #allocation13 [shape = 's32[1]{0}', space=sflag, size = 0x4, scoped, tag = 'scoped memory for tpu_custom_call.1']
    #allocation14 [shape = 'u8[8192]{0}', space=vmem, size = 0x2000, scoped, tag = 'output window, operand 0']
    %14 = vsyncpa [#allocation7], 0
    %s15 = scalar_lea.sflag [#allocation7], 1
    %16 = vsyncpa %s15, 0
    %17 = vsyncpa [#allocation10], 0
    %s18 = scalar_lea.sflag [#allocation10], 1
    %19 = vsyncpa %s18, 0
    %20 = vsyncpa [#allocation13], 0
    %21 = vsyncpa [#allocation8], 0
    %s22 = scalar_lea.sflag [#allocation8], 1
    %23 = vsyncpa %s22, 0
    loop: start=0, step=1, limit=4
    $region2: #{tpu_custom_call.1} parent=1 // loop_pre_header
      _
    $region3: #{tpu_custom_call.1} parent=1 // loop_header
      %s25 = sphi 0, %s29
      %p26 = scmp.ge.s32.totalorder %s25, 4
      %s32 = sphi 0, %s51
      %s33 = sphi 0, %s47
      %s34 = sphi 0, %s43
      %s35 = sphi 0, %s32
      %s36 = sphi 0, %s33
      %s37 = sphi 0, %s34
      %s38 = sphi 0, %s35
      %s39 = sphi 0, %s36
      %s40 = sphi 0, %s37
      %s56 = sphi 0, %s58
      %s59 = sphi 0, %s56
      %s60 = sphi 0, %s59
      %s76 = sphi 0, %s60
      %s82 = sphi 0, %s84
      %s85 = sphi 0, %s82
      %s86 = sphi 0, %s85
      %s102 = sphi 0, %s86
      %s108 = sphi 0, %s110
      %s111 = sphi 0, %s108
      %s112 = sphi 0, %s111
      %s128 = sphi 0, %s112
      %s134 = sphi 0, %s136
      %s137 = sphi 0, %s134
      %s138 = sphi 0, %s137
      %s154 = sphi 0, %s138
      %s158 = sphi 0, %s158
      %s160 = sphi 0, %s158
      %s161 = sphi 0, %s160
      %s175 = sphi 0, %s161
      %s179 = sphi 0, %s179
      %s181 = sphi 0, %s179
      %s182 = sphi 0, %s181
      %s196 = sphi 0, %s182
      %s202 = sphi 0, %s204
      %s205 = sphi 0, %s202
      %s206 = sphi 0, %s205
      %s222 = sphi 0, %s206
      %s228 = sphi 0, %s230
      %s231 = sphi 0, %s228
      %s232 = sphi 0, %s231
      %s248 = sphi 0, %s232
      %s258 = sphi 0, %s260
      %s261 = sphi 0, %s258
      %s262 = sphi 0, %s261
      %s278 = sphi 0, %s262
      %s286 = sphi 0, %s288
      %s289 = sphi 0, %s286
      %s290 = sphi 0, %s289
      %s306 = sphi 0, %s290
    $region4: #{tpu_custom_call.1} parent=1 // loop_header_branch
      %28 = sbr.rel (%p26) target = $region8
    $region5: #{tpu_custom_call.1} parent=1 // loop_body
      %s30 = ssub.s32 %s25, 1
      %s31 = ssub.s32 %s25, 2
      %s41 = sadd.s32 1, %s34
      %p42 = scmp.ge.s32.totalorder %s41, 1
      %s43 = scalar_select %p42, 0, %s41
      %s44 = sadd.s32 1, %s33
      %s45 = scalar_select %p42, %s44, %s33
      %p46 = scmp.ge.s32.totalorder %s45, 1
      %s47 = scalar_select %p46, 0, %s45
      %s48 = sadd.s32 1, %s32
      %s49 = scalar_select %p46, %s48, %s32
      %p50 = scmp.ge.s32.totalorder %s49, 2
      %s51 = scalar_select %p50, 0, %s49
      %s52 = ssub.s32 %s32, %s51
      %s53 = ssub.s32 %s34, %s43
      %s54 = sor.u32 %s52, %s53
      %p55 = scmp.eq.s32.totalorder %s54, 0
      %s57 = sadd.s32 %s56, 1
      %s58 = scalar_select %p55, %s56, %s57
      %p61 = pneg %p55
      %p62 = scmp.eq.s32.totalorder %s25, 1
      %p63 = por %p61, %p62
      %p64 = scmp.ne.s32.totalorder %s56, %s59
      %p65 = scmp.eq.s32.totalorder %s25, 0
      %p66 = por %p64, %p65
      %p67 = scmp.ne.s32.totalorder %s56, %s59
      %p68 = scmp.eq.s32.totalorder %s30, 1
      %p69 = por %p67, %p68
      %p70 = scmp.ne.s32.totalorder %s59, %s60
      %p71 = scmp.eq.s32.totalorder %s30, 0
      %p72 = por %p70, %p71
      %p73 = scmp.ne.s32.totalorder %s59, %s60
      %p74 = scmp.eq.s32.totalorder %s31, 1
      %p75 = por %p73, %p74
      %p77 = scmp.ne.s32.totalorder %s60, %s76
      %p78 = scmp.eq.s32.totalorder %s31, 0
      %p79 = por %p77, %p78
      %s80 = ssub.s32 %s32, %s51
      %p81 = scmp.eq.s32.totalorder %s80, 0
      %s83 = sadd.s32 %s82, 1
      %s84 = scalar_select %p81, %s82, %s83
      %p87 = pneg %p81
      %p88 = scmp.eq.s32.totalorder %s25, 1
      %p89 = por %p87, %p88
      %p90 = scmp.ne.s32.totalorder %s82, %s85
      %p91 = scmp.eq.s32.totalorder %s25, 0
      %p92 = por %p90, %p91
      %p93 = scmp.ne.s32.totalorder %s82, %s85
      %p94 = scmp.eq.s32.totalorder %s30, 1
      %p95 = por %p93, %p94
      %p96 = scmp.ne.s32.totalorder %s85, %s86
      %p97 = scmp.eq.s32.totalorder %s30, 0
      %p98 = por %p96, %p97
      %p99 = scmp.ne.s32.totalorder %s85, %s86
      %p100 = scmp.eq.s32.totalorder %s31, 1
      %p101 = por %p99, %p100
      %p103 = scmp.ne.s32.totalorder %s86, %s102
      %p104 = scmp.eq.s32.totalorder %s31, 0
      %p105 = por %p103, %p104
      %s106 = ssub.s32 %s32, %s51
      %p107 = scmp.eq.s32.totalorder %s106, 0
      %s109 = sadd.s32 %s108, 1
      %s110 = scalar_select %p107, %s108, %s109
      %p113 = pneg %p107
      %p114 = scmp.eq.s32.totalorder %s25, 1
      %p115 = por %p113, %p114
      %p116 = scmp.ne.s32.totalorder %s108, %s111
      %p117 = scmp.eq.s32.totalorder %s25, 0
      %p118 = por %p116, %p117
      %p119 = scmp.ne.s32.totalorder %s108, %s111
      %p120 = scmp.eq.s32.totalorder %s30, 1
      %p121 = por %p119, %p120
      %p122 = scmp.ne.s32.totalorder %s111, %s112
      %p123 = scmp.eq.s32.totalorder %s30, 0
      %p124 = por %p122, %p123
      %p125 = scmp.ne.s32.totalorder %s111, %s112
      %p126 = scmp.eq.s32.totalorder %s31, 1
      %p127 = por %p125, %p126
      %p129 = scmp.ne.s32.totalorder %s112, %s128
      %p130 = scmp.eq.s32.totalorder %s31, 0
      %p131 = por %p129, %p130
      %s132 = ssub.s32 %s33, %s47
      %p133 = scmp.eq.s32.totalorder %s132, 0
      %s135 = sadd.s32 %s134, 1
      %s136 = scalar_select %p133, %s134, %s135
      %p139 = pneg %p133
      %p140 = scmp.eq.s32.totalorder %s25, 1
      %p141 = por %p139, %p140
      %p142 = scmp.ne.s32.totalorder %s134, %s137
      %p143 = scmp.eq.s32.totalorder %s25, 0
      %p144 = por %p142, %p143
      %p145 = scmp.ne.s32.totalorder %s134, %s137
      %p146 = scmp.eq.s32.totalorder %s30, 1
      %p147 = por %p145, %p146
      %p148 = scmp.ne.s32.totalorder %s137, %s138
      %p149 = scmp.eq.s32.totalorder %s30, 0
      %p150 = por %p148, %p149
      %p151 = scmp.ne.s32.totalorder %s137, %s138
      %p152 = scmp.eq.s32.totalorder %s31, 1
      %p153 = por %p151, %p152
      %p155 = scmp.ne.s32.totalorder %s138, %s154
      %p156 = scmp.eq.s32.totalorder %s31, 0
      %p157 = por %p155, %p156
      %s159 = sadd.s32 %s158, 1
      %p162 = scmp.eq.s32.totalorder %s25, 1
      %p163 = scmp.ne.s32.totalorder %s158, %s160
      %p164 = scmp.eq.s32.totalorder %s25, 0
      %p165 = por %p163, %p164
      %p166 = scmp.ne.s32.totalorder %s158, %s160
      %p167 = scmp.eq.s32.totalorder %s30, 1
      %p168 = por %p166, %p167
      %p169 = scmp.ne.s32.totalorder %s160, %s161
      %p170 = scmp.eq.s32.totalorder %s30, 0
      %p171 = por %p169, %p170
      %p172 = scmp.ne.s32.totalorder %s160, %s161
      %p173 = scmp.eq.s32.totalorder %s31, 1
      %p174 = por %p172, %p173
      %p176 = scmp.ne.s32.totalorder %s161, %s175
      %p177 = scmp.eq.s32.totalorder %s31, 0
      %p178 = por %p176, %p177
      %s180 = sadd.s32 %s179, 1
      %p183 = scmp.eq.s32.totalorder %s25, 1
      %p184 = scmp.ne.s32.totalorder %s179, %s181
      %p185 = scmp.eq.s32.totalorder %s25, 0
      %p186 = por %p184, %p185
      %p187 = scmp.ne.s32.totalorder %s179, %s181
      %p188 = scmp.eq.s32.totalorder %s30, 1
      %p189 = por %p187, %p188
      %p190 = scmp.ne.s32.totalorder %s181, %s182
      %p191 = scmp.eq.s32.totalorder %s30, 0
      %p192 = por %p190, %p191
      %p193 = scmp.ne.s32.totalorder %s181, %s182
      %p194 = scmp.eq.s32.totalorder %s31, 1
      %p195 = por %p193, %p194
      %p197 = scmp.ne.s32.totalorder %s182, %s196
      %p198 = scmp.eq.s32.totalorder %s31, 0
      %p199 = por %p197, %p198
      %s200 = ssub.s32 %s32, %s51
      %p201 = scmp.eq.s32.totalorder %s200, 0
      %s203 = sadd.s32 %s202, 1
      %s204 = scalar_select %p201, %s202, %s203
      %p207 = pneg %p201
      %p208 = scmp.eq.s32.totalorder %s25, 1
      %p209 = por %p207, %p208
      %p210 = scmp.ne.s32.totalorder %s202, %s205
      %p211 = scmp.eq.s32.totalorder %s25, 0
      %p212 = por %p210, %p211
      %p213 = scmp.ne.s32.totalorder %s202, %s205
      %p214 = scmp.eq.s32.totalorder %s30, 1
      %p215 = por %p213, %p214
      %p216 = scmp.ne.s32.totalorder %s205, %s206
      %p217 = scmp.eq.s32.totalorder %s30, 0
      %p218 = por %p216, %p217
      %p219 = scmp.ne.s32.totalorder %s205, %s206
      %p220 = scmp.eq.s32.totalorder %s31, 1
      %p221 = por %p219, %p220
      %p223 = scmp.ne.s32.totalorder %s206, %s222
      %p224 = scmp.eq.s32.totalorder %s31, 0
      %p225 = por %p223, %p224
      %s226 = ssub.s32 %s32, %s51
      %p227 = scmp.eq.s32.totalorder %s226, 0
      %s229 = sadd.s32 %s228, 1
      %s230 = scalar_select %p227, %s228, %s229
      %p233 = pneg %p227
      %p234 = scmp.eq.s32.totalorder %s25, 1
      %p235 = por %p233, %p234
      %p236 = scmp.ne.s32.totalorder %s228, %s231
      %p237 = scmp.eq.s32.totalorder %s25, 0
      %p238 = por %p236, %p237
      %p239 = scmp.ne.s32.totalorder %s228, %s231
      %p240 = scmp.eq.s32.totalorder %s30, 1
      %p241 = por %p239, %p240
      %p242 = scmp.ne.s32.totalorder %s231, %s232
      %p243 = scmp.eq.s32.totalorder %s30, 0
      %p244 = por %p242, %p243
      %p245 = scmp.ne.s32.totalorder %s231, %s232
      %p246 = scmp.eq.s32.totalorder %s31, 1
      %p247 = por %p245, %p246
      %p249 = scmp.ne.s32.totalorder %s232, %s248
      %p250 = scmp.eq.s32.totalorder %s31, 0
      %p251 = por %p249, %p250
      %s252 = ssub.s32 %s32, %s51
      %s253 = ssub.s32 %s33, %s47
      %s254 = sor.u32 %s252, %s253
      %s255 = ssub.s32 %s34, %s43
      %s256 = sor.u32 %s254, %s255
      %p257 = scmp.eq.s32.totalorder %s256, 0
      %s259 = sadd.s32 %s258, 1
      %s260 = scalar_select %p257, %s258, %s259
      %p263 = pneg %p257
      %p264 = scmp.eq.s32.totalorder %s25, 1
      %p265 = por %p263, %p264
      %p266 = scmp.ne.s32.totalorder %s258, %s261
      %p267 = scmp.eq.s32.totalorder %s25, 0
      %p268 = por %p266, %p267
      %p269 = scmp.ne.s32.totalorder %s258, %s261
      %p270 = scmp.eq.s32.totalorder %s30, 1
      %p271 = por %p269, %p270
      %p272 = scmp.ne.s32.totalorder %s261, %s262
      %p273 = scmp.eq.s32.totalorder %s30, 0
      %p274 = por %p272, %p273
      %p275 = scmp.ne.s32.totalorder %s261, %s262
      %p276 = scmp.eq.s32.totalorder %s31, 1
      %p277 = por %p275, %p276
      %p279 = scmp.ne.s32.totalorder %s262, %s278
      %p280 = scmp.eq.s32.totalorder %s31, 0
      %p281 = por %p279, %p280
      %s282 = ssub.s32 %s32, %s51
      %s283 = ssub.s32 %s33, %s47
      %s284 = sor.u32 %s282, %s283
      %p285 = scmp.eq.s32.totalorder %s284, 0
      %s287 = sadd.s32 %s286, 1
      %s288 = scalar_select %p285, %s286, %s287
      %p291 = pneg %p285
      %p292 = scmp.eq.s32.totalorder %s25, 1
      %p293 = por %p291, %p292
      %p294 = scmp.ne.s32.totalorder %s286, %s289
      %p295 = scmp.eq.s32.totalorder %s25, 0
      %p296 = por %p294, %p295
      %p297 = scmp.ne.s32.totalorder %s286, %s289
      %p298 = scmp.eq.s32.totalorder %s30, 1
      %p299 = por %p297, %p298
      %p300 = scmp.ne.s32.totalorder %s289, %s290
      %p301 = scmp.eq.s32.totalorder %s30, 0
      %p302 = por %p300, %p301
      %p303 = scmp.ne.s32.totalorder %s289, %s290
      %p304 = scmp.eq.s32.totalorder %s31, 1
      %p305 = por %p303, %p304
      %p307 = scmp.ne.s32.totalorder %s290, %s306
      %p308 = scmp.eq.s32.totalorder %s31, 0
      %p309 = por %p307, %p308
      %p310 = scmp.le.s32.totalorder 1, %s25
      %p311 = scmp.lt.s32.totalorder %s25, 3
      %p312 = pnand %p310, %p311
      %p313 = pneg %p312
      // Predicated region
      $region9: #{tpu_custom_call.1} parent=5 // pred_check
        _
      $region10: #{tpu_custom_call.1} parent=5 // pred_check_branch
        %315 = sbr.rel (%p312) target = $region12
      $region11: #{tpu_custom_call.1} parent=5 // pred_region
        %s316 = ssub.s32 %s25, 1
        // Predicated region
        $region13: #{tpu_custom_call.1} parent=11 // pred_check
          %p317 = pneg %p150
        $region14: #{tpu_custom_call.1} parent=11 // pred_check_branch
          %319 = sbr.rel (%p317) target = $region16
        $region15: #{tpu_custom_call.1} parent=11 // pred_region
          %s320 = smul.u32 2, %s36
          %p321 = scmp.lt.s32.totalorder %s320, 1
          %s322 = scalar_select %p321, %s320, 1
          %s323 = smul.addr %s322, 4
          %s324 = scalar_lea.vmem %s3, %s323
          %s325 = smul.u32 2, %s36
        $region16: #{tpu_custom_call.1} parent=11 // pred_fallthru
          _
        // Predicated region
        $region17: #{tpu_custom_call.1} parent=11 // pred_check
          %p326 = pneg %p171
        $region18: #{tpu_custom_call.1} parent=11 // pred_check_branch
          %328 = sbr.rel (%p326) target = $region20
        $region19: #{tpu_custom_call.1} parent=11 // pred_region
          %s330 = ssub.s32 384, 384
          %331 = vsyncadd [#allocation10], %s330
          %s332 = sshll.u32 [#allocation11], 4
          %s333 = int_to_ptr.vmem [resolvable:$true] %s332
          %338 = dma.hbm_to_vmem [thread:$0]  %s4, 384, %s333, [#allocation10], 64, 64, 4
        $region20: #{tpu_custom_call.1} parent=11 // pred_fallthru
          _
        // Predicated region
        $region21: #{tpu_custom_call.1} parent=11 // pred_check
          %p339 = pneg %p192
        $region22: #{tpu_custom_call.1} parent=11 // pred_check_branch
          %341 = sbr.rel (%p339) target = $region24
        $region23: #{tpu_custom_call.1} parent=11 // pred_region
          %s343 = ssub.s32 16, 16
          %344 = vsyncadd [#allocation13], %s343
          %s346 = sshll.u32 [#allocation12], 4
          %s347 = int_to_ptr.vmem [resolvable:$true] %s346
          %349 = dma.hbm_to_vmem [thread:$0]  %s5, 16, %s347, [#allocation13]
        $region24: #{tpu_custom_call.1} parent=11 // pred_fallthru
          _
      $region12: #{tpu_custom_call.1} parent=5 // pred_fallthru
        _
      %p350 = scmp.lt.s32.totalorder %s25, 2
      // Predicated region
      $region25: #{tpu_custom_call.1} parent=5 // pred_check
        %p351 = pneg %p350
      $region26: #{tpu_custom_call.1} parent=5 // pred_check_branch
        %353 = sbr.rel (%p351) target = $region28
      $region27: #{tpu_custom_call.1} parent=5 // pred_region
        // Predicated region
        $region29: #{tpu_custom_call.1} parent=27 // pred_check
          %p354 = pneg %p66
        $region30: #{tpu_custom_call.1} parent=27 // pred_check_branch
          %356 = sbr.rel (%p354) target = $region32
        $region31: #{tpu_custom_call.1} parent=27 // pred_region
          %s357 = sand.u32 %s56, 1
          %s358 = scalar_lea.sflag [#allocation7], %s357
          %s359 = sand.u32 %s56, 1
          %s360 = smul.addr %s359, 8
          %s361 = scalar_lea.vmem [#allocation6], %s360
          %s362 = smul.u32 2, %s34
          %s364 = ssub.s32 128, 128
          %365 = vsyncadd %s358, %s364
          %s366 = smul.addr %s32, 2
          %s367 = sadd.s32 %s362, %s366
          %s368 = smul.addr %s367, 64
          %s369 = scalar_lea.hbm %s0, %s368
          %s370 = sshll.u32 %s361, 4
          %s371 = int_to_ptr.vmem [resolvable:$true] %s370
          %376 = dma.hbm_to_vmem [thread:$0]  %s369, 128, %s371, %s358, 64, 64, 4
        $region32: #{tpu_custom_call.1} parent=27 // pred_fallthru
          _
        // Predicated region
        $region33: #{tpu_custom_call.1} parent=27 // pred_check
          %p377 = pneg %p92
        $region34: #{tpu_custom_call.1} parent=27 // pred_check_branch
          %379 = sbr.rel (%p377) target = $region36
        $region35: #{tpu_custom_call.1} parent=27 // pred_region
          %s380 = sand.u32 %s25, 1
          %s381 = scalar_lea.sflag [#allocation10], %s380
          %s382 = sand.u32 %s82, 1
          %s383 = smul.addr %s382, 20
          %s384 = scalar_lea.vmem [#allocation9], %s383
          %s386 = ssub.s32 320, 320
          %387 = vsyncadd %s381, %s386
          %s388 = smul.addr %s32, 5
          %s389 = smul.addr %s388, 64
          %s390 = scalar_lea.hbm %s1, %s389
          %s391 = sshll.u32 %s384, 4
          %s392 = int_to_ptr.vmem [resolvable:$true] %s391
          %397 = dma.hbm_to_vmem [thread:$0]  %s390, 320, %s392, %s381, 64, 64, 4
        $region36: #{tpu_custom_call.1} parent=27 // pred_fallthru
          _
        // Predicated region
        $region37: #{tpu_custom_call.1} parent=27 // pred_check
          %p398 = pneg %p118
        $region38: #{tpu_custom_call.1} parent=27 // pred_check_branch
          %400 = sbr.rel (%p398) target = $region40
        $region39: #{tpu_custom_call.1} parent=27 // pred_region
          %p401 = scmp.lt.s32.totalorder %s32, 1
          %s402 = scalar_select %p401, %s32, 1
          %s403 = scalar_lea.vmem %s2, %s402
        $region40: #{tpu_custom_call.1} parent=27 // pred_fallthru
          _
        // Predicated region
        $region41: #{tpu_custom_call.1} parent=27 // pred_check
          %p404 = pneg %p212
        $region42: #{tpu_custom_call.1} parent=27 // pred_check_branch
          %406 = sbr.rel (%p404) target = $region44
        $region43: #{tpu_custom_call.1} parent=27 // pred_region
          %p407 = scmp.lt.s32.totalorder %s32, 1
          %s408 = scalar_select %p407, %s32, 1
          %s409 = scalar_lea.vmem %s6, %s408
        $region44: #{tpu_custom_call.1} parent=27 // pred_fallthru
          _
        // Predicated region
        $region45: #{tpu_custom_call.1} parent=27 // pred_check
          %p410 = pneg %p238
        $region46: #{tpu_custom_call.1} parent=27 // pred_check_branch
          %412 = sbr.rel (%p410) target = $region48
        $region47: #{tpu_custom_call.1} parent=27 // pred_region
          %p413 = scmp.lt.s32.totalorder %s32, 1
          %s414 = scalar_select %p413, %s32, 1
          %s415 = scalar_lea.vmem %s7, %s414
        $region48: #{tpu_custom_call.1} parent=27 // pred_fallthru
          _
        // Predicated region
        $region49: #{tpu_custom_call.1} parent=27 // pred_check
          %p416 = pneg %p268
        $region50: #{tpu_custom_call.1} parent=27 // pred_check_branch
          %418 = sbr.rel (%p416) target = $region52
        $region51: #{tpu_custom_call.1} parent=27 // pred_region
          %s419 = smul.u32 2, %s33
          %p420 = scmp.lt.s32.totalorder %s32, 1
          %s421 = scalar_select %p420, %s32, 1
          %p422 = scmp.lt.s32.totalorder %s419, 1
          %s423 = scalar_select %p422, %s419, 1
          %p424 = scmp.lt.s32.totalorder %s34, 0
          %s425 = scalar_select %p424, %s34, 0
          %s426 = sadd.s32 %s425, %s423
          %s427 = smul.addr %s421, 2
          %s428 = sadd.s32 %s426, %s427
          %s429 = smul.addr %s428, 4
          %s430 = scalar_lea.vmem %s8, %s429
          %s431 = smul.u32 2, %s33
        $region52: #{tpu_custom_call.1} parent=27 // pred_fallthru
          _
      $region28: #{tpu_custom_call.1} parent=5 // pred_fallthru
        _
      %p432 = scmp.le.s32.totalorder 1, %s25
      %p433 = scmp.lt.s32.totalorder %s25, 3
      %p434 = pnand %p432, %p433
      %p435 = pneg %p434
      // Predicated region
      $region53: #{tpu_custom_call.1} parent=5 // pred_check
        _
      $region54: #{tpu_custom_call.1} parent=5 // pred_check_branch
        %437 = sbr.rel (%p434) target = $region56
      $region55: #{tpu_custom_call.1} parent=5 // pred_region
        %s438 = ssub.s32 %s25, 1
        %s439 = sand.u32 %s59, 1
        %s440 = scalar_lea.sflag [#allocation7], %s439
        %s441 = sand.u32 %s59, 1
        %s442 = smul.addr %s441, 8
        %s443 = scalar_lea.vmem [#allocation6], %s442
        // Predicated region
        $region57: #{tpu_custom_call.1} parent=55 // pred_check
          %p444 = pneg %p72
        $region58: #{tpu_custom_call.1} parent=55 // pred_check_branch
          %446 = sbr.rel (%p444) target = $region60
        $region59: #{tpu_custom_call.1} parent=55 // pred_region
          %447 = dma.done %s440, 128
        $region60: #{tpu_custom_call.1} parent=55 // pred_fallthru
          _
        %s448 = sand.u32 %s30, 1
        %s449 = scalar_lea.sflag [#allocation10], %s448
        %s450 = sand.u32 %s85, 1
        %s451 = smul.addr %s450, 20
        %s452 = scalar_lea.vmem [#allocation9], %s451
        // Predicated region
        $region61: #{tpu_custom_call.1} parent=55 // pred_check
          %p453 = pneg %p98
        $region62: #{tpu_custom_call.1} parent=55 // pred_check_branch
          %455 = sbr.rel (%p453) target = $region64
        $region63: #{tpu_custom_call.1} parent=55 // pred_region
          %456 = dma.done %s449, 320
        $region64: #{tpu_custom_call.1} parent=55 // pred_fallthru
          _
        // Predicated region
        $region65: #{tpu_custom_call.1} parent=55 // pred_check
          %p457 = pneg %p171
        $region66: #{tpu_custom_call.1} parent=55 // pred_check_branch
          %459 = sbr.rel (%p457) target = $region68
        $region67: #{tpu_custom_call.1} parent=55 // pred_region
          %460 = dma.done [#allocation10], 384
        $region68: #{tpu_custom_call.1} parent=55 // pred_fallthru
          _
        // Predicated region
        $region69: #{tpu_custom_call.1} parent=55 // pred_check
          %p461 = pneg %p192
        $region70: #{tpu_custom_call.1} parent=55 // pred_check_branch
          %463 = sbr.rel (%p461) target = $region72
        $region71: #{tpu_custom_call.1} parent=55 // pred_region
          %464 = dma.done [#allocation13], 16
        $region72: #{tpu_custom_call.1} parent=55 // pred_fallthru
          _
        %s465 = sand.u32 %s59, 1
        %s466 = scalar_lea.sflag [#allocation7], %s465
        %s467 = sand.u32 %s59, 1
        %s468 = smul.addr %s467, 8
        %s469 = scalar_lea.vmem [#allocation6], %s468
        %p470 = pneg %p72
        %p471 = pneg %p69
        %s472 = sand.u32 %s30, 1
        %s473 = scalar_lea.sflag [#allocation10], %s472
        %s474 = sand.u32 %s85, 1
        %s475 = smul.addr %s474, 20
        %s476 = scalar_lea.vmem [#allocation9], %s475
        %p477 = pneg %p98
        %p478 = pneg %p95
        %p479 = scmp.lt.s32.totalorder %s35, 1
        %s480 = scalar_select %p479, %s35, 1
        %s481 = scalar_lea.vmem %s2, %s480
        %p482 = pneg %p124
        %p483 = pneg %p121
        %s484 = smul.u32 2, %s36
        %p485 = scmp.lt.s32.totalorder %s484, 1
        %s486 = scalar_select %p485, %s484, 1
        %s487 = smul.addr %s486, 4
        %s488 = scalar_lea.vmem %s3, %s487
        %p489 = pneg %p150
        %p490 = pneg %p147
        %p491 = pneg %p171
        %p492 = pneg %p168
        %p493 = pneg %p192
        %p494 = pneg %p189
        %p495 = scmp.lt.s32.totalorder %s35, 1
        %s496 = scalar_select %p495, %s35, 1
        %s497 = scalar_lea.vmem %s6, %s496
        %p498 = pneg %p218
        %p499 = pneg %p215
        %p500 = scmp.lt.s32.totalorder %s35, 1
        %s501 = scalar_select %p500, %s35, 1
        %s502 = scalar_lea.vmem %s7, %s501
        %p503 = pneg %p244
        %p504 = pneg %p241
        %s505 = smul.u32 2, %s36
        %p506 = scmp.lt.s32.totalorder %s35, 1
        %s507 = scalar_select %p506, %s35, 1
        %p508 = scmp.lt.s32.totalorder %s505, 1
        %s509 = scalar_select %p508, %s505, 1
        %p510 = scmp.lt.s32.totalorder %s37, 0
        %s511 = scalar_select %p510, %s37, 0
        %s512 = sadd.s32 %s511, %s509
        %s513 = smul.addr %s507, 2
        %s514 = sadd.s32 %s512, %s513
        %s515 = smul.addr %s514, 4
        %s516 = scalar_lea.vmem %s8, %s515
        %p517 = pneg %p274
        %p518 = pneg %p271
        %p519 = pneg %p302
        %p520 = pneg %p299
        %s521 = sand.u32 %s289, 1
        %s522 = scalar_lea.sflag [#allocation8], %s521
        %s523 = sand.u32 %s289, 1
        %s524 = smul.addr %s523, 8
        %s525 = scalar_lea.vmem [#allocation14], %s524
        %s526 = smul.u32 2, %s37
        %p527 = scmp.lt.s32.totalorder %s35, 1
        %s528 = scalar_select %p527, %s35, 1
        %s529 = scalar_lea.vmem %s2, %s528
        %s530 = smul.u32 2, %s36
        %p531 = scmp.lt.s32.totalorder %s530, 1
        %s532 = scalar_select %p531, %s530, 1
        %s533 = smul.addr %s532, 4
        %s534 = scalar_lea.vmem %s3, %s533
        %s535 = smul.u32 2, %s36
        %p536 = scmp.lt.s32.totalorder %s35, 1
        %s537 = scalar_select %p536, %s35, 1
        %s538 = scalar_lea.vmem %s6, %s537
        %p539 = scmp.lt.s32.totalorder %s35, 1
        %s540 = scalar_select %p539, %s35, 1
        %s541 = scalar_lea.vmem %s7, %s540
        %s542 = smul.u32 2, %s36
        %p543 = scmp.lt.s32.totalorder %s35, 1
        %s544 = scalar_select %p543, %s35, 1
        %p545 = scmp.lt.s32.totalorder %s542, 1
        %s546 = scalar_select %p545, %s542, 1
        %p547 = scmp.lt.s32.totalorder %s37, 0
        %s548 = scalar_select %p547, %s37, 0
        %s549 = sadd.s32 %s548, %s546
        %s550 = smul.addr %s544, 2
        %s551 = sadd.s32 %s549, %s550
        %s552 = smul.addr %s551, 4
        %s553 = scalar_lea.vmem %s8, %s552
        %s554 = smul.u32 2, %s36
        %s555 = smul.u32 2, %s36
        %p557 = scmp.eq.s32.totalorder %s37, 0
        // Predicated region
        $region73: #{tpu_custom_call.1} parent=55 // pred_check
          %p558 = pneg %p557
        $region74: #{tpu_custom_call.1} parent=55 // pred_check_branch
          %560 = sbr.rel (%p558) target = $region76
        $region75: #{tpu_custom_call.1} parent=55 // pred_region
          %vm561 = vcmask 7168
          %562 = vst.msk [vmem:[#allocation2] sm:$0xff] %vm561, -1e+30
          %563 = vst.msk [vmem:[#allocation2 + $0x8] sm:$0xff] %vm561, -1e+30
          %564 = vst.msk [vmem:[#allocation3] sm:$0xff] %vm561, 0.0
          %565 = vst.msk [vmem:[#allocation3 + $0x8] sm:$0xff] %vm561, 0.0
          %566 = vst [vmem:[#allocation4] sm:$0xff] 0.0
          %567 = vst [vmem:[#allocation4 + $0x8] sm:$0xff] 0.0
          %v568 = vld [vmem:[%s534] sm:$0xf]
          %v569 = vld [vmem:[%s534 + $0x4] sm:$0xf]
          %v570 = vld [vmem:[#allocation11] sm:$0xf]
          %v571 = vld [vmem:[#allocation11 + $0x4] sm:$0xf]
          %v572 = vld [vmem:[#allocation11 + $0x8] sm:$0xf]
          %v573 = vld [vmem:[#allocation11 + $0xc] sm:$0xf]
          %v574 = vld [vmem:[#allocation11 + $0x10] sm:$0xf]
          %v575 = vld [vmem:[#allocation11 + $0x14] sm:$0xf]
          %v576 = vld [vmem:[#allocation12] sm:$0x1]
          %v578 = vlaneseq
          %v579 = vshrl.u32 %v578, 7
          %v580 = vsub.s32 0, %v579
          %v581 = vrot.slane %v576, %v580
          %v585 = vunpack.c.l.b16 %v568
          %v586 = vunpack.c.l.b16 %v569
          %v587 = vpack.c.b16 %v586, %v585
          %v594 = vunpack.c.l.b16 %v570
          %v595 = vunpack.c.l.b16 %v571
          %v596 = vunpack.c.l.b16 %v572
          %v597 = vunpack.c.l.b16 %v573
          %v598 = vunpack.c.l.b16 %v574
          %v599 = vunpack.c.l.b16 %v575
          %v600 = vpack.c.b16 %v595, %v594
          %v601 = vpack.c.b16 %v597, %v596
          %v602 = vpack.c.b16 %v599, %v598
          %vm606 = vcmask 392192
          %v608 = vsel %vm606, %v587, 0
          %610 = vmatprep.subr.bf16.mxu0 0
          %611 = vmatpush1.bf16.msra.mxu0 %v600
          %612 = vmatprep.subr.bf16.mxu0 0
          %613 = vmatpush1.bf16.msra.mxu0 %v601
          %614 = vmatprep.subr.bf16.mxu0 0
          %615 = vmatpush1.bf16.msra.mxu0 %v602
          %616 = vmatprep.subr.bf16.mxu0 0
          %617 = vmatpush1.bf16.msra.mxu0 0
          %618 = vmatprep.subr.bf16.mxu0 0
          %619 = vmatpush1.bf16.msra.mxu0 0
          %620 = vmatprep.subr.bf16.mxu0 0
          %621 = vmatpush1.bf16.msra.mxu0 0
          %622 = vmatprep.subr.bf16.mxu0 0
          %623 = vmatpush1.bf16.msra.mxu0 0
          %624 = vmatprep.subr.bf16.mxu0 0
          %625 = vmatpush1.bf16.msra.mxu0 0
          %626 = vmatprep.subr.bf16.mxu0 0
          %627 = vmatpush1.bf16.msra.mxu0 0
          %628 = vmatprep.subr.bf16.mxu0 0
          %629 = vmatpush1.bf16.msra.mxu0 0
          %630 = vmatprep.subr.bf16.mxu0 0
          %631 = vmatpush1.bf16.msra.mxu0 0
          %632 = vmatprep.subr.bf16.mxu0 0
          %633 = vmatpush1.bf16.msra.mxu0 0
          %634 = vmatprep.subr.bf16.mxu0 0
          %635 = vmatpush1.bf16.msra.mxu0 0
          %636 = vmatprep.subr.bf16.mxu0 0
          %637 = vmatpush1.bf16.msra.mxu0 0
          %638 = vmatprep.subr.bf16.mxu0 0
          %639 = vmatpush1.bf16.msra.mxu0 0
          %640 = vmatprep.subr.bf16.mxu0 0
          %641 = vmatpush1.bf16.msra.mxu0 0
          %642 = vmatprep.mubr.bf16.mxu0 0
          %643 = vmatmul.mubr.bf16.gmra.mrb[0].mxu0 %v608
          %v644 = vpop.f32.mrb[0].mxu0
          %v645 = vadd.f32 %v581, %v644
          %v646 = vpop.f32.mrb[0].mxu0
          %v647 = vpop.f32.mrb[0].mxu0
          %v648 = vadd.f32 %v581, %v647
          %v649 = vpop.f32.mrb[0].mxu0
          %650 = vdwg.mxu0
          %vm651 = vcmp.gt.f32.partialorder %v645, 0.0
          %vm652 = vcmp.gt.f32.partialorder %v648, 0.0
          %v653 = vmul.f32 %v645, 1.442695
          %v654 = vpow.pop %v653
          %v655 = vmul.f32 %v648, 1.442695
          %v656 = vpow.pop %v655
          %v657 = vsub.f32 %v654, 1.0
          %v658 = vsub.f32 %v656, 1.0
          %v659 = vsel %vm651, %v645, %v657
          %v660 = vsel %vm652, %v648, %v658
          %v661 = vld [vmem:[%s541] sm:$0x1]
          %v663 = vlaneseq
          %v664 = vshrl.u32 %v663, 7
          %v665 = vsub.s32 0, %v664
          %v666 = vrot.slane %v661, %v665
          %v668 = vmul.f32 %v659, %v666
          %v669 = vmul.f32 %v660, %v666
          %670 = vadd.xlane.f32.xlu0 %v668
          %v671 = vpop.xlane.xlu0 %670
          %672 = vadd.xlane.f32.xlu0 %v669
          %v673 = vpop.xlane.xlu0 %672
          %674 = vst.msk [vmem:[#allocation5] sm:$0xff] %vm561, %v671
          %675 = vst.msk [vmem:[#allocation5 + $0x8] sm:$0xff] %vm561, %v673
        $region76: #{tpu_custom_call.1} parent=55 // pred_fallthru
          _
        %v676 = vld [vmem:[%s443] sm:$0xf]
        %v677 = vld [vmem:[%s443 + $0x4] sm:$0xf]
        %v678 = vld [vmem:[%s452] sm:$0xf]
        %v679 = vld [vmem:[%s452 + $0x4] sm:$0xf]
        %v680 = vld [vmem:[%s452 + $0x8] sm:$0xf]
        %v681 = vld [vmem:[%s452 + $0xc] sm:$0xf]
        %v682 = vld [vmem:[%s452 + $0x10] sm:$0xf]
        %v683 = vld [vmem:[%s529] sm:$0x1]
        %v685 = vlaneseq
        %v686 = vshrl.u32 %v685, 7
        %v687 = vsub.s32 0, %v686
        %v688 = vrot.slane %v683, %v687
        %v692 = vunpack.c.l.b16 %v676
        %v693 = vunpack.c.l.b16 %v677
        %v694 = vpack.c.b16 %v693, %v692
        %v700 = vunpack.c.l.b16 %v678
        %v701 = vunpack.c.l.b16 %v679
        %v702 = vunpack.c.l.b16 %v680
        %v703 = vunpack.c.l.b16 %v681
        %v704 = vunpack.c.l.b16 %v682
        %v705 = vpack.c.b16 %v701, %v700
        %v706 = vpack.c.b16 %v703, %v702
        %v707 = vpack.c.b16 %v704, %v704
        %vm710 = vcmask 326656
        %v712 = vsel %vm710, %v694, 0
        %vm714 = vcmask 1043456
        %v716 = vsel %vm714, %v707, 0
        %718 = vmatprep.subr.bf16.mxu0 0
        %719 = vmatpush1.bf16.msra.mxu0 %v705
        %720 = vmatprep.subr.bf16.mxu0 0
        %721 = vmatpush1.bf16.msra.mxu0 %v706
        %722 = vmatprep.subr.bf16.mxu0 0
        %723 = vmatpush1.bf16.msra.mxu0 %v716
        %724 = vmatprep.subr.bf16.mxu0 0
        %725 = vmatpush1.bf16.msra.mxu0 0
        %726 = vmatprep.subr.bf16.mxu0 0
        %727 = vmatpush1.bf16.msra.mxu0 0
        %728 = vmatprep.subr.bf16.mxu0 0
        %729 = vmatpush1.bf16.msra.mxu0 0
        %730 = vmatprep.subr.bf16.mxu0 0
        %731 = vmatpush1.bf16.msra.mxu0 0
        %732 = vmatprep.subr.bf16.mxu0 0
        %733 = vmatpush1.bf16.msra.mxu0 0
        %734 = vmatprep.subr.bf16.mxu0 0
        %735 = vmatpush1.bf16.msra.mxu0 0
        %736 = vmatprep.subr.bf16.mxu0 0
        %737 = vmatpush1.bf16.msra.mxu0 0
        %738 = vmatprep.subr.bf16.mxu0 0
        %739 = vmatpush1.bf16.msra.mxu0 0
        %740 = vmatprep.subr.bf16.mxu0 0
        %741 = vmatpush1.bf16.msra.mxu0 0
        %742 = vmatprep.subr.bf16.mxu0 0
        %743 = vmatpush1.bf16.msra.mxu0 0
        %744 = vmatprep.subr.bf16.mxu0 0
        %745 = vmatpush1.bf16.msra.mxu0 0
        %746 = vmatprep.subr.bf16.mxu0 0
        %747 = vmatpush1.bf16.msra.mxu0 0
        %748 = vmatprep.subr.bf16.mxu0 0
        %749 = vmatpush1.bf16.msra.mxu0 0
        %750 = vmatprep.mubr.bf16.mxu0 0
        %751 = vmatmul.mubr.bf16.gmra.mrb[0].mxu0 %v712
        %v752 = vpop.f32.mrb[0].mxu0
        %v753 = vadd.f32 %v688, %v752
        %v754 = vpop.f32.mrb[0].mxu0
        %v755 = vpop.f32.mrb[0].mxu0
        %v756 = vadd.f32 %v688, %v755
        %v757 = vpop.f32.mrb[0].mxu0
        %758 = vdwg.mxu0
        %vm759 = vcmp.gt.f32.partialorder %v753, 0.0
        %vm760 = vcmp.gt.f32.partialorder %v756, 0.0
        %v761 = vmul.f32 %v753, 1.442695
        %v762 = vpow.pop %v761
        %v763 = vmul.f32 %v756, 1.442695
        %v764 = vpow.pop %v763
        %v765 = vsub.f32 %v762, 1.0
        %v766 = vsub.f32 %v764, 1.0
        %v767 = vsel %vm759, %v753, %v765
        %v768 = vsel %vm760, %v756, %v766
        %v769 = vld [vmem:[%s538] sm:$0x1]
        %770 = vmatprep.subr.mxu0 0.0
        %771 = vmatpush1.xpose.msra.mxu0 %v767
        %772 = vmatprep.subr.mxu0 0.0
        %773 = vmatpush1.xpose.msra.mxu0 %v768
        %774 = vmatprep.subr.mxu0 0.0
        %775 = vmatpush1.xpose.msra.mxu0 0.0
        %776 = vmatprep.subr.mxu0 0.0
        %777 = vmatpush1.xpose.msra.mxu0 0.0
        %778 = vmatprep.subr.mxu0 0.0
        %779 = vmatpush1.xpose.msra.mxu0 0.0
        %780 = vmatprep.subr.mxu0 0.0
        %781 = vmatpush1.xpose.msra.mxu0 0.0
        %782 = vmatprep.subr.mxu0 0.0
        %783 = vmatpush1.xpose.msra.mxu0 0.0
        %784 = vmatprep.subr.mxu0 0.0
        %785 = vmatpush1.xpose.msra.mxu0 0.0
        %786 = vmatprep.subr.mxu0 0.0
        %787 = vmatpush1.xpose.msra.mxu0 0.0
        %788 = vmatprep.subr.mxu0 0.0
        %789 = vmatpush1.xpose.msra.mxu0 0.0
        %790 = vmatprep.subr.mxu0 0.0
        %791 = vmatpush1.xpose.msra.mxu0 0.0
        %792 = vmatprep.subr.mxu0 0.0
        %793 = vmatpush1.xpose.msra.mxu0 0.0
        %794 = vmatprep.subr.mxu0 0.0
        %795 = vmatpush1.xpose.msra.mxu0 0.0
        %796 = vmatprep.subr.mxu0 0.0
        %797 = vmatpush1.xpose.msra.mxu0 0.0
        %798 = vmatprep.subr.mxu0 0.0
        %799 = vmatpush1.xpose.msra.mxu0 0.0
        %800 = vmatprep.subr.mxu0 0.0
        %801 = vmatpush1.xpose.msra.mxu0 0.0
        %802 = vmatprep.subr.mxu0 0.0
        %803 = vmatpush1.xpose.msra.mxu0 0.0
        %804 = vmatprep.subr.mxu0 0.0
        %805 = vmatpush1.xpose.msra.mxu0 0.0
        %806 = vmatprep.subr.mxu0 0.0
        %807 = vmatpush1.xpose.msra.mxu0 0.0
        %808 = vmatprep.subr.mxu0 0.0
        %809 = vmatpush1.xpose.msra.mxu0 0.0
        %810 = vmatprep.subr.mxu0 0.0
        %811 = vmatpush1.xpose.msra.mxu0 0.0
        %812 = vmatprep.subr.mxu0 0.0
        %813 = vmatpush1.xpose.msra.mxu0 0.0
        %814 = vmatprep.subr.mxu0 0.0
        %815 = vmatpush1.xpose.msra.mxu0 0.0
        %816 = vmatprep.subr.mxu0 0.0
        %817 = vmatpush1.xpose.msra.mxu0 0.0
        %818 = vmatprep.subr.mxu0 0.0
        %819 = vmatpush1.xpose.msra.mxu0 0.0
        %820 = vmatprep.subr.mxu0 0.0
        %821 = vmatpush1.xpose.msra.mxu0 0.0
        %822 = vmatprep.subr.mxu0 0.0
        %823 = vmatpush1.xpose.msra.mxu0 0.0
        %824 = vmatprep.subr.mxu0 0.0
        %825 = vmatpush1.xpose.msra.mxu0 0.0
        %826 = vmatprep.subr.mxu0 0.0
        %827 = vmatpush1.xpose.msra.mxu0 0.0
        %828 = vmatprep.subr.mxu0 0.0
        %829 = vmatpush1.xpose.msra.mxu0 0.0
        %830 = vmatprep.subr.mxu0 0.0
        %831 = vmatpush1.xpose.msra.mxu0 0.0
        %832 = vmatprep.subr.mxu0 0.0
        %833 = vmatpush1.xpose.msra.mxu0 0.0
        %834 = vmatprep.mubr.f32.mxu0 0.0
        %835 = vmatmul.mubr.f32.gmra.mrb[0].mxu0 %v769
        %v836 = vpop.f32.mrb[0].mxu0
        %v837 = vadd.f32 0.0, %v836
        %v838 = vpop.f32.mrb[0].mxu0
        %839 = vdwg.mxu0
        %v840 = vld [vmem:[#allocation5] sm:$0xff]
        %v841 = vld [vmem:[#allocation5 + $0x8] sm:$0xff]
        %843 = vset.pattern.permute.xlu0 0
        %844 = vperm.xlu0 %843, %v840
        %v845 = vpop.permute.xlu0 %844
        %848 = vset.pattern.permute.xlu0 0
        %849 = vperm.xlu0 %848, %v841
        %v850 = vpop.permute.xlu0 %849
        %v852 = vlaneseq
        %v853 = vshrl.u32 %v852, 7
        %v854 = vsub.s32 0, %v853
        %v855 = vrot.slane %v837, %v854
        %v856 = vadd.f32 %v845, %v855
        %v857 = vadd.f32 %v850, %v855
        %vm858 = vcmp.ge.f32.partialorder %v856, 0.0
        %vm859 = vcmp.ge.f32.partialorder %v857, 0.0
        %v860 = vmul.f32 %v856, 0.01
        %v861 = vmul.f32 %v857, 0.01
        %v862 = vsel %vm858, %v856, %v860
        %v863 = vsel %vm859, %v857, %v861
        %v864 = vld [vmem:[%s553] sm:$0xf]
        %v865 = vld [vmem:[%s553 + $0x4] sm:$0xf]
        %v866 = vunpack.c.l.bf16 %v864
        %v867 = vunpack.c.l.bf16 %v865
        %v868 = vld [vmem:[#allocation2] sm:$0xff]
        %v869 = vld [vmem:[#allocation2 + $0x8] sm:$0xff]
        %vm870 = vcmask 130048
        %v871 = vsel %vm870, %v862, -inf
        %872 = vmax.xlane.f32.xlu0 %v871
        %v873 = vpop.xlane.xlu0 %872
        %v874 = vsel %vm870, %v863, -inf
        %875 = vmax.xlane.f32.xlu0 %v874
        %v876 = vpop.xlane.xlu0 %875
        %v877 = vmax.f32 %v868, %v873
        %v878 = vmax.f32 %v869, %v876
        %v879 = vsub.f32 %v868, %v877
        %v880 = vsub.f32 %v869, %v878
        %v881 = vmul.f32 %v879, 1.442695
        %v882 = vpow.pop %v881
        %v883 = vmul.f32 %v880, 1.442695
        %v884 = vpow.pop %v883
        %886 = vset.pattern.permute.xlu0 0
        %887 = vperm.xlu0 %886, %v877
        %v888 = vpop.permute.xlu0 %887
        %891 = vset.pattern.permute.xlu0 0
        %892 = vperm.xlu0 %891, %v878
        %v893 = vpop.permute.xlu0 %892
        %v895 = vsub.f32 %v862, %v888
        %v896 = vsub.f32 %v863, %v893
        %v897 = vmul.f32 %v895, 1.442695
        %v898 = vpow.pop %v897
        %v899 = vmul.f32 %v896, 1.442695
        %v900 = vpow.pop %v899
        %v901 = vmul.f32 %v898, %v866
        %v902 = vmul.f32 %v900, %v867
        %v903 = vld [vmem:[#allocation3] sm:$0xff]
        %v904 = vld [vmem:[#allocation3 + $0x8] sm:$0xff]
        %v905 = vmul.f32 %v882, %v903
        %v906 = vmul.f32 %v884, %v904
        %v907 = vsel %vm870, %v901, 0.0
        %908 = vadd.xlane.f32.xlu0 %v907
        %v909 = vpop.xlane.xlu0 %908
        %v910 = vsel %vm870, %v902, 0.0
        %911 = vadd.xlane.f32.xlu0 %v910
        %v912 = vpop.xlane.xlu0 %911
        %v913 = vadd.f32 %v905, %v909
        %v914 = vadd.f32 %v906, %v912
        %vm915 = vcmask 7168
        %916 = vst.msk [vmem:[#allocation3] sm:$0xff] %vm915, %v913
        %917 = vst.msk [vmem:[#allocation3 + $0x8] sm:$0xff] %vm915, %v914
        %v918 = vld [vmem:[#allocation4] sm:$0xff]
        %v919 = vld [vmem:[#allocation4 + $0x8] sm:$0xff]
        %921 = vset.pattern.permute.xlu0 0
        %922 = vperm.xlu0 %921, %v882
        %v923 = vpop.permute.xlu0 %922
        %926 = vset.pattern.permute.xlu0 0
        %927 = vperm.xlu0 %926, %v884
        %v928 = vpop.permute.xlu0 %927
        %v930 = vmul.f32 %v923, %v918
        %v931 = vmul.f32 %v928, %v919
        %v932 = vpack.c.bf16 %v902, %v901
        %v933 = vpack.c.bf16 %v768, %v767
        %v935 = vsel %vm870, %v932, 0
        %937 = vmatprep.subr.bf16.mxu0 0
        %938 = vmatpush1.bf16.msra.mxu0 %v933
        %939 = vmatprep.subr.bf16.mxu0 0
        %940 = vmatpush1.bf16.msra.mxu0 0
        %941 = vmatprep.subr.bf16.mxu0 0
        %942 = vmatpush1.bf16.msra.mxu0 0
        %943 = vmatprep.subr.bf16.mxu0 0
        %944 = vmatpush1.bf16.msra.mxu0 0
        %945 = vmatprep.subr.bf16.mxu0 0
        %946 = vmatpush1.bf16.msra.mxu0 0
        %947 = vmatprep.subr.bf16.mxu0 0
        %948 = vmatpush1.bf16.msra.mxu0 0
        %949 = vmatprep.subr.bf16.mxu0 0
        %950 = vmatpush1.bf16.msra.mxu0 0
        %951 = vmatprep.subr.bf16.mxu0 0
        %952 = vmatpush1.bf16.msra.mxu0 0
        %953 = vmatprep.subr.bf16.mxu0 0
        %954 = vmatpush1.bf16.msra.mxu0 0
        %955 = vmatprep.subr.bf16.mxu0 0
        %956 = vmatpush1.bf16.msra.mxu0 0
        %957 = vmatprep.subr.bf16.mxu0 0
        %958 = vmatpush1.bf16.msra.mxu0 0
        %959 = vmatprep.subr.bf16.mxu0 0
        %960 = vmatpush1.bf16.msra.mxu0 0
        %961 = vmatprep.subr.bf16.mxu0 0
        %962 = vmatpush1.bf16.msra.mxu0 0
        %963 = vmatprep.subr.bf16.mxu0 0
        %964 = vmatpush1.bf16.msra.mxu0 0
        %965 = vmatprep.subr.bf16.mxu0 0
        %966 = vmatpush1.bf16.msra.mxu0 0
        %967 = vmatprep.subr.bf16.mxu0 0
        %968 = vmatpush1.bf16.msra.mxu0 0
        %969 = vmatprep.mubr.bf16.mxu0 0
        %970 = vmatmul.mubr.bf16.gmra.mrb[0].mxu0 %v935
        %v971 = vpop.f32.mrb[0].mxu0
        %v972 = vadd.f32 0.0, %v971
        %v973 = vpop.f32.mrb[0].mxu0
        %v974 = vpop.f32.mrb[0].mxu0
        %v975 = vadd.f32 0.0, %v974
        %v976 = vpop.f32.mrb[0].mxu0
        %977 = vdwg.mxu0
        %v978 = vadd.f32 %v930, %v972
        %v979 = vadd.f32 %v931, %v975
        %980 = vst [vmem:[#allocation4] sm:$0xff] %v978
        %981 = vst [vmem:[#allocation4 + $0x8] sm:$0xff] %v979
        %982 = vst.msk [vmem:[#allocation2] sm:$0xff] %vm915, %v877
        %983 = vst.msk [vmem:[#allocation2 + $0x8] sm:$0xff] %vm915, %v878
        // Predicated region
        $region77: #{tpu_custom_call.1} parent=55 // pred_check
          %p984 = pneg %p557
        $region78: #{tpu_custom_call.1} parent=55 // pred_check_branch
          %986 = sbr.rel (%p984) target = $region80
        $region79: #{tpu_custom_call.1} parent=55 // pred_region
          %v987 = vld [vmem:[#allocation3] sm:$0xff]
          %v988 = vld [vmem:[#allocation3 + $0x8] sm:$0xff]
          %v989 = vadd.f32 %v987, 1e-09
          %v990 = vadd.f32 %v988, 1e-09
          %v991 = vrcp.pop %v989
          %v992 = vrcp.pop %v990
          %v993 = vld [vmem:[#allocation4] sm:$0xff]
          %v994 = vld [vmem:[#allocation4 + $0x8] sm:$0xff]
          %996 = vset.pattern.permute.xlu0 0
          %997 = vperm.xlu0 %996, %v991
          %v998 = vpop.permute.xlu0 %997
          %1001 = vset.pattern.permute.xlu0 0
          %1002 = vperm.xlu0 %1001, %v992
          %v1003 = vpop.permute.xlu0 %1002
          %v1005 = vmul.f32 %v993, %v998
          %v1006 = vmul.f32 %v994, %v1003
          %vm1007 = vcmp.gt.f32.partialorder %v1005, 0.0
          %vm1008 = vcmp.gt.f32.partialorder %v1006, 0.0
          %v1009 = vmul.f32 %v1005, 1.442695
          %v1010 = vpow.pop %v1009
          %v1011 = vmul.f32 %v1006, 1.442695
          %v1012 = vpow.pop %v1011
          %v1013 = vsub.f32 %v1010, 1.0
          %v1014 = vsub.f32 %v1012, 1.0
          %v1015 = vsel %vm1007, %v1005, %v1013
          %v1016 = vsel %vm1008, %v1006, %v1014
          %v1017 = vpack.c.bf16 %v1016, %v1015
          %v1019 = vunpack.c.l.b16 %v1017
          %v1020 = vunpack.c.h.b16 %v1017
          %v1021 = vpack.c.b16 %v1019, %v1019
          %v1022 = vpack.c.b16 %v1020, %v1020
          %1025 = vst [vmem:[%s525] sm:$0xf] %v1021
          %1026 = vst [vmem:[%s525 + $0x4] sm:$0xf] %v1022
        $region80: #{tpu_custom_call.1} parent=55 // pred_fallthru
          _
        %s1027 = sand.u32 %s289, 1
        %s1028 = scalar_lea.sflag [#allocation8], %s1027
        %s1029 = sand.u32 %s289, 1
        %s1030 = smul.addr %s1029, 8
        %s1031 = scalar_lea.vmem [#allocation14], %s1030
        // Predicated region
        $region81: #{tpu_custom_call.1} parent=55 // pred_check
          %p1032 = pneg %p299
        $region82: #{tpu_custom_call.1} parent=55 // pred_check_branch
          %1034 = sbr.rel (%p1032) target = $region84
        $region83: #{tpu_custom_call.1} parent=55 // pred_region
          %s1035 = smul.u32 2, %s36
          %s1037 = ssub.s32 128, 128
          %1038 = vsyncadd %s1028, %s1037
          %s1039 = smul.addr %s35, 2
          %s1040 = sadd.s32 %s1035, %s1039
          %s1041 = smul.addr %s1040, 64
          %s1042 = scalar_lea.hbm %s9, %s1041
          %s1043 = sshll.u32 %s1031, 4
          %s1044 = int_to_ptr.vmem [resolvable:$true] %s1043
          %1049 = dma.vmem_to_hbm [thread:$0]  %s1044, 128, %s1042, %s1028, 64, 64, 4
        $region84: #{tpu_custom_call.1} parent=55 // pred_fallthru
          _
      $region56: #{tpu_custom_call.1} parent=5 // pred_fallthru
        _
      %p1050 = scmp.le.s32.totalorder 2, %s25
      // Predicated region
      $region85: #{tpu_custom_call.1} parent=5 // pred_check
        %p1051 = pneg %p1050
      $region86: #{tpu_custom_call.1} parent=5 // pred_check_branch
        %1053 = sbr.rel (%p1051) target = $region88
      $region87: #{tpu_custom_call.1} parent=5 // pred_region
        %s1054 = ssub.s32 %s25, 2
        // Predicated region
        $region89: #{tpu_custom_call.1} parent=87 // pred_check
          %p1055 = pneg %p305
        $region90: #{tpu_custom_call.1} parent=87 // pred_check_branch
          %1057 = sbr.rel (%p1055) target = $region92
        $region91: #{tpu_custom_call.1} parent=87 // pred_region
          %s1058 = sand.u32 %s290, 1
          %s1059 = scalar_lea.sflag [#allocation8], %s1058
          %s1060 = sand.u32 %s290, 1
          %s1061 = smul.addr %s1060, 8
          %s1062 = scalar_lea.vmem [#allocation14], %s1061
          %1063 = dma.done %s1059, 128
        $region92: #{tpu_custom_call.1} parent=87 // pred_fallthru
          _
      $region88: #{tpu_custom_call.1} parent=5 // pred_fallthru
        _
    $region6: #{tpu_custom_call.1} parent=1 // loop_footer
      %s29 = sadd.s32 1, %s25
    $region7: #{tpu_custom_call.1} parent=1 // loop_footer_branch
      %24 = sbr.rel target = $region3
    $region8: #{tpu_custom_call.1} parent=1 // loop_exit
      _
    %1064 = vsyncpa [#allocation7], 1
    %s1065 = scalar_lea.sflag [#allocation7], 1
    %1066 = vsyncpa %s1065, 1
    %1067 = vsyncpa [#allocation10], 1
    %s1068 = scalar_lea.sflag [#allocation10], 1
    %1069 = vsyncpa %s1068, 1
    %1070 = vsyncpa [#allocation13], 1
    %1071 = vsyncpa [#allocation8], 1
    %s1072 = scalar_lea.sflag [#allocation8], 1
    %1073 = vsyncpa %s1072, 1

</llo_original>
